<compile_context>
chip_gen: v7x
topology: tpu7x:2x2x1
jax: 0.10.0
libtpu: 0.0.40
codegen_flags: <defaults>
</compile_context>

<pallas_src>
import jax
import jax.numpy as jnp
from jax.experimental import pallas as pl
from jax.experimental.pallas import tpu as pltpu


_VMEM_LIMIT_BYTES = 32 * 1024 * 1024   # explicit scoped-VMEM limit (safe on all gens)
_VMEM_TILE_BUDGET = 24 * 1024 * 1024   # head-room under the scoped limit


# ---------------------------------------------------------------------------
# helpers
# ---------------------------------------------------------------------------
def _pick_tile_m(n, *, max_tile=1024, min_steps=4):
    """Row tile: a multiple of 16 (bf16 sublane packing) that divides n,
    <= max_tile, keeping >= min_steps grid steps when possible so each v7x
    TensorCore gets >= 2 steps of per-core double-buffering."""
    if n <= 16:
        return n
    best = None
    t = 16
    cap = min(n, max_tile)
    while t <= cap:
        if n % t == 0:
            best = t
        t += 16
    if best is None:
        return n  # n not a multiple of 16: fall back to one full-array block
    while (n // best) < min_steps:
        half = best // 2
        if half >= 16 and half % 16 == 0 and n % half == 0:
            best = half
        else:
            break
    return best


def _fit_tile_to_vmem(tile_m, n, per_row_io_bytes, resident_bytes,
                      budget=_VMEM_TILE_BUDGET):
    """Shrink tile_m if double-buffered row tiles + resident weights would
    blow the scoped-VMEM budget (matters once f_in / f_hid grow)."""
    while tile_m > 16:
        est = 2 * tile_m * per_row_io_bytes + 2 * resident_bytes
        if est <= budget:
            break
        half = tile_m // 2
        if half % 16 == 0 and n % half == 0:
            tile_m = half
        else:
            break
    return tile_m


def _row_spec(tile_m, width):
    return pl.BlockSpec((tile_m, width), lambda i: (i, 0))


def _resident_spec(shape):
    return pl.BlockSpec(shape, lambda i: (0, 0))


def _nbytes(a):
    return int(a.size) * a.dtype.itemsize


def _cost_estimate(flops, in_arrays, out_bytes):
    bytes_accessed = int(out_bytes) + sum(_nbytes(a) for a in in_arrays)
    return pl.CostEstimate(flops=int(flops), transcendentals=0,
                           bytes_accessed=bytes_accessed)


# ---------------------------------------------------------------------------
# Kernels
# ---------------------------------------------------------------------------
def _mlp2_kernel(x_ref, w1_ref, b1_ref, w2_ref, b2_ref, o_ref):
    # Cast to bf16 in-kernel (no wrapper-side cast pass); f32 accumulate.
    x = x_ref[...].astype(jnp.bfloat16)
    h = jnp.dot(x, w1_ref[...], preferred_element_type=jnp.float32) + b1_ref[...]
    h = jnp.maximum(h, 0.0).astype(jnp.bfloat16)
    o = jnp.dot(h, w2_ref[...], preferred_element_type=jnp.float32) + b2_ref[...]
    o_ref[...] = o.astype(o_ref.dtype)


def _triplet_kernel(ox_ref, tx_ref,
                    ew1_ref, eb1_ref, ew2_ref, eb2_ref,   # online encoder
                    pw1_ref, pb1_ref, pw2_ref, pb2_ref,   # predictor
                    tw1_ref, tb1_ref, tw2_ref, tb2_ref,   # target encoder
                    q_ref, ty_ref):
    # ---- online path: encoder -> predictor (fused, no HBM round trip) ----
    ox = ox_ref[...].astype(jnp.bfloat16)
    h = jnp.dot(ox, ew1_ref[...], preferred_element_type=jnp.float32) + eb1_ref[...]
    h = jnp.maximum(h, 0.0).astype(jnp.bfloat16)
    y = jnp.dot(h, ew2_ref[...], preferred_element_type=jnp.float32) + eb2_ref[...]
    y = y.astype(jnp.bfloat16)
    g = jnp.dot(y, pw1_ref[...], preferred_element_type=jnp.float32) + pb1_ref[...]
    g = jnp.maximum(g, 0.0).astype(jnp.bfloat16)
    q = jnp.dot(g, pw2_ref[...], preferred_element_type=jnp.float32) + pb2_ref[...]
    q_ref[...] = q.astype(q_ref.dtype)

    # ---- target path: frozen encoder ----
    tx = tx_ref[...].astype(jnp.bfloat16)
    th = jnp.dot(tx, tw1_ref[...], preferred_element_type=jnp.float32) + tb1_ref[...]
    th = jnp.maximum(th, 0.0).astype(jnp.bfloat16)
    ty = jnp.dot(th, tw2_ref[...], preferred_element_type=jnp.float32) + tb2_ref[...]
    ty_ref[...] = ty.astype(ty_ref.dtype)


# ---------------------------------------------------------------------------
# Wrappers
# ---------------------------------------------------------------------------
def mlp2(x, w1, b1, w2, b2, *, tile_m=None):
    """Fused 2-layer MLP, tiled over the node (row) dimension. bf16 output."""
    n, f_in = x.shape
    f_hid = w1.shape[1]
    f_out = w2.shape[1]
    if tile_m is None:
        tile_m = _pick_tile_m(n)
    resident_bytes = sum(_nbytes(a) for a in (w1, b1, w2, b2))
    per_row_io = f_in * x.dtype.itemsize + f_out * 2
    tile_m = _fit_tile_to_vmem(tile_m, n, per_row_io, resident_bytes)
    assert n % tile_m == 0
    grid = (n // tile_m,)

    flops = 2 * n * (f_in * f_hid + f_hid * f_out)
    cost = _cost_estimate(flops, (x, w1, b1, w2, b2), n * f_out * 2)

    return pl.pallas_call(
        _mlp2_kernel,
        out_shape=jax.ShapeDtypeStruct((n, f_out), jnp.bfloat16),
        grid_spec=pltpu.PrefetchScalarGridSpec(
            num_scalar_prefetch=0,
            grid=grid,
            in_specs=[
                _row_spec(tile_m, f_in),
                _resident_spec((f_in, f_hid)),
                _resident_spec((1, f_hid)),
                _resident_spec((f_hid, f_out)),
                _resident_spec((1, f_out)),
            ],
            out_specs=_row_spec(tile_m, f_out),
        ),
        compiler_params=pltpu.CompilerParams(
            dimension_semantics=("parallel",),
            vmem_limit_bytes=_VMEM_LIMIT_BYTES),
        cost_estimate=cost,
    )(x, w1, b1, w2, b2)


def triplet_forward(online_x, target_x, online_enc, predictor, target_enc,
                    *, tile_m=None):
    """Single-launch fused forward: (online enc -> predictor) + target enc."""
    n, f_in = online_x.shape
    assert target_x.shape == (n, f_in)
    ew1, eb1, ew2, eb2 = online_enc
    pw1, pb1, pw2, pb2 = predictor
    tw1, tb1, tw2, tb2 = target_enc
    f_hid = ew1.shape[1]
    f_emb = ew2.shape[1]
    f_pred = pw1.shape[1]

    weights = (ew1, eb1, ew2, eb2, pw1, pb1, pw2, pb2, tw1, tb1, tw2, tb2)
    if tile_m is None:
        tile_m = _pick_tile_m(n)
    resident_bytes = sum(_nbytes(a) for a in weights)
    per_row_io = (f_in * online_x.dtype.itemsize
                  + f_in * target_x.dtype.itemsize
                  + 2 * f_emb * 2)          # two bf16 output rows
    tile_m = _fit_tile_to_vmem(tile_m, n, per_row_io, resident_bytes)
    assert n % tile_m == 0
    grid = (n // tile_m,)

    flops = (2 * n * (f_in * f_hid + f_hid * f_emb)        # online encoder
             + 2 * n * (f_emb * f_pred + f_pred * f_emb)   # predictor
             + 2 * n * (f_in * f_hid + f_hid * f_emb))     # target encoder
    args = (online_x, target_x) + weights
    cost = _cost_estimate(flops, args, 2 * n * f_emb * 2)

    out_shape = (jax.ShapeDtypeStruct((n, f_emb), jnp.bfloat16),
                 jax.ShapeDtypeStruct((n, f_emb), jnp.bfloat16))

    return pl.pallas_call(
        _triplet_kernel,
        out_shape=out_shape,
        grid_spec=pltpu.PrefetchScalarGridSpec(
            num_scalar_prefetch=0,
            grid=grid,
            in_specs=[
                _row_spec(tile_m, f_in),           # online_x tile
                _row_spec(tile_m, f_in),           # target_x tile
                _resident_spec((f_in, f_hid)),     # online encoder
                _resident_spec((1, f_hid)),
                _resident_spec((f_hid, f_emb)),
                _resident_spec((1, f_emb)),
                _resident_spec((f_emb, f_pred)),   # predictor
                _resident_spec((1, f_pred)),
                _resident_spec((f_pred, f_emb)),
                _resident_spec((1, f_emb)),
                _resident_spec((f_in, f_hid)),     # target encoder
                _resident_spec((1, f_hid)),
                _resident_spec((f_hid, f_emb)),
                _resident_spec((1, f_emb)),
            ],
            out_specs=[
                _row_spec(tile_m, f_emb),          # online_q
                _row_spec(tile_m, f_emb),          # target_y
            ],
        ),
        compiler_params=pltpu.CompilerParams(
            dimension_semantics=("parallel",),
            vmem_limit_bytes=_VMEM_LIMIT_BYTES),
        cost_estimate=cost,
    )(*args)


# ---------------------------------------------------------------------------
# Parameters (deterministic, synthetic — no checkpoint load)
# ---------------------------------------------------------------------------
def init_mlp_params(key, f_in, f_hidden, f_out):
    k1, k2 = jax.random.split(key)
    w1 = (jax.random.normal(k1, (f_in, f_hidden), jnp.float32)
          * (1.0 / (f_in ** 0.5))).astype(jnp.bfloat16)
    b1 = jnp.zeros((1, f_hidden), jnp.float32)
    w2 = (jax.random.normal(k2, (f_hidden, f_out), jnp.float32)
          * (1.0 / (f_hidden ** 0.5))).astype(jnp.bfloat16)
    b2 = jnp.zeros((1, f_out), jnp.float32)
    return (w1, b1, w2, b2)


# ---------------------------------------------------------------------------
# TripletBgrl
# ---------------------------------------------------------------------------
class TripletBgrlPallas:
    def __init__(self, key, f_in, f_hidden, f_embed, f_pred_hidden):
        k_enc, k_tgt, k_pred = jax.random.split(key, 3)
        self.online_encoder = init_mlp_params(k_enc, f_in, f_hidden, f_embed)
        # target encoder: same architecture, reset (independent) params, frozen.
        self.target_encoder = init_mlp_params(k_tgt, f_in, f_hidden, f_embed)
        self.predictor = init_mlp_params(k_pred, f_embed, f_pred_hidden, f_embed)

    def trainable_parameters(self):
        return list(self.online_encoder) + list(self.predictor)

    def update_target_network(self, mm):
        assert 0.0 <= mm <= 1.0
        self.target_encoder = tuple(
            (mm * k.astype(jnp.float32)
             + (1.0 - mm) * q.astype(jnp.float32)).astype(k.dtype)
            for q, k in zip(self.online_encoder, self.target_encoder))

    def forward_target(self, target_x):
        return jax.lax.stop_gradient(mlp2(target_x, *self.target_encoder))

    def __call__(self, online_x, target_x):
        if online_x.shape == target_x.shape:
            online_q, target_y = triplet_forward(
                online_x, target_x,
                self.online_encoder, self.predictor, self.target_encoder)
        else:
            # Fallback (rare): unequal node counts -> separate launches.
            online_y = mlp2(online_x, *self.online_encoder)
            online_q = mlp2(online_y, *self.predictor)
            target_y = mlp2(target_x, *self.target_encoder)
        return online_q, jax.lax.stop_gradient(target_y)


# ---------------------------------------------------------------------------
# Pure-JAX reference (same bf16-operand / f32-accumulate mixed precision)
# ---------------------------------------------------------------------------
def mlp2_ref(x, w1, b1, w2, b2):
    x = x.astype(jnp.bfloat16)
    h = jnp.dot(x, w1, preferred_element_type=jnp.float32) + b1
    h = jnp.maximum(h, 0.0).astype(jnp.bfloat16)
    return jnp.dot(h, w2, preferred_element_type=jnp.float32) + b2


if __name__ == "__main__":
    # 1024 nodes -> auto tile of 256 rows, 4-step parallel grid (>= 2 steps
    # per TensorCore on v7x for per-core double-buffering). 128-wide features.
    N, F_IN, F_HID, F_EMB, F_PRED = 1024, 128, 128, 128, 128

    key = jax.random.PRNGKey(0)
    k_model, k_on, k_tg = jax.random.split(key, 3)

    model = TripletBgrlPallas(k_model, F_IN, F_HID, F_EMB, F_PRED)

    # Node features stored bf16 end-to-end (halves input HBM traffic); the
    # kernel's in-body astype also accepts f32 inputs unchanged.
    online_x = jax.random.normal(k_on, (N, F_IN), jnp.float32).astype(jnp.bfloat16)
    target_x = jax.random.normal(k_tg, (N, F_IN), jnp.float32).astype(jnp.bfloat16)

    online_q, target_y = model(online_x, target_x)
    jax.block_until_ready(online_q)
    jax.block_until_ready(target_y)

    extra_y = model.forward_target(target_x)
    jax.block_until_ready(extra_y)

    # sanity check against plain-JAX reference (same mixed precision; kernel
    # outputs are bf16, so compare in f32 with bf16-quantization tolerance)
    online_y_ref = mlp2_ref(online_x, *model.online_encoder)
    online_q_ref = mlp2_ref(online_y_ref, *model.predictor)
    target_y_ref = mlp2_ref(target_x, *model.target_encoder)

    assert jnp.allclose(online_q.astype(jnp.float32), online_q_ref,
                        atol=3e-2, rtol=3e-2)
    assert jnp.allclose(target_y.astype(jnp.float32), target_y_ref,
                        atol=3e-2, rtol=3e-2)
    assert jnp.allclose(extra_y.astype(jnp.float32), target_y_ref,
                        atol=3e-2, rtol=3e-2)

    print("KERNEL_OK")
</pallas_src>

<mosaic_0001>
module attributes {stable_mosaic.version = 11 : i64} {
  func.func @_triplet_kernel(%arg0: i32, %arg1: memref<256x128xbf16, #tpu.memory_space<vmem>>, %arg2: memref<256x128xbf16, #tpu.memory_space<vmem>>, %arg3: memref<128x128xbf16, #tpu.memory_space<vmem>>, %arg4: memref<1x128xf32, #tpu.memory_space<vmem>>, %arg5: memref<128x128xbf16, #tpu.memory_space<vmem>>, %arg6: memref<1x128xf32, #tpu.memory_space<vmem>>, %arg7: memref<128x128xbf16, #tpu.memory_space<vmem>>, %arg8: memref<1x128xf32, #tpu.memory_space<vmem>>, %arg9: memref<128x128xbf16, #tpu.memory_space<vmem>>, %arg10: memref<1x128xf32, #tpu.memory_space<vmem>>, %arg11: memref<128x128xbf16, #tpu.memory_space<vmem>>, %arg12: memref<1x128xf32, #tpu.memory_space<vmem>>, %arg13: memref<128x128xbf16, #tpu.memory_space<vmem>>, %arg14: memref<1x128xf32, #tpu.memory_space<vmem>>, %arg15: memref<256x128xbf16, #tpu.memory_space<vmem>>, %arg16: memref<256x128xbf16, #tpu.memory_space<vmem>>) attributes {dimension_semantics = [#tpu.dimension_semantics<parallel>], iteration_bounds = array<i64: 4>, scalar_prefetch = 0 : i64, scratch_operands = 0 : i64, tpu.core_type = #tpu.core_type<tc>, window_params = [{transform_indices = @transform_0, window_bounds = array<i64: 256, 128>}, {transform_indices = @transform_1, window_bounds = array<i64: 256, 128>}, {pipeline_mode = #tpu.pipeline_mode<synchronous>, transform_indices = @transform_2, window_bounds = array<i64: 128, 128>}, {pipeline_mode = #tpu.pipeline_mode<synchronous>, transform_indices = @transform_3, window_bounds = array<i64: 1, 128>}, {pipeline_mode = #tpu.pipeline_mode<synchronous>, transform_indices = @transform_4, window_bounds = array<i64: 128, 128>}, {pipeline_mode = #tpu.pipeline_mode<synchronous>, transform_indices = @transform_5, window_bounds = array<i64: 1, 128>}, {pipeline_mode = #tpu.pipeline_mode<synchronous>, transform_indices = @transform_6, window_bounds = array<i64: 128, 128>}, {pipeline_mode = #tpu.pipeline_mode<synchronous>, transform_indices = @transform_7, window_bounds = array<i64: 1, 128>}, {pipeline_mode = #tpu.pipeline_mode<synchronous>, transform_indices = @transform_8, window_bounds = array<i64: 128, 128>}, {pipeline_mode = #tpu.pipeline_mode<synchronous>, transform_indices = @transform_9, window_bounds = array<i64: 1, 128>}, {pipeline_mode = #tpu.pipeline_mode<synchronous>, transform_indices = @transform_10, window_bounds = array<i64: 128, 128>}, {pipeline_mode = #tpu.pipeline_mode<synchronous>, transform_indices = @transform_11, window_bounds = array<i64: 1, 128>}, {pipeline_mode = #tpu.pipeline_mode<synchronous>, transform_indices = @transform_12, window_bounds = array<i64: 128, 128>}, {pipeline_mode = #tpu.pipeline_mode<synchronous>, transform_indices = @transform_13, window_bounds = array<i64: 1, 128>}, {transform_indices = @transform_14, window_bounds = array<i64: 256, 128>}, {transform_indices = @transform_15, window_bounds = array<i64: 256, 128>}]} {
    %c0 = arith.constant 0 : index
    %c0_0 = arith.constant 0 : index
    %0 = vector.load %arg1[%c0, %c0_0] : memref<256x128xbf16, #tpu.memory_space<vmem>>, vector<256x128xbf16>
    %c0_1 = arith.constant 0 : index
    %c0_2 = arith.constant 0 : index
    %1 = vector.load %arg3[%c0_1, %c0_2] : memref<128x128xbf16, #tpu.memory_space<vmem>>, vector<128x128xbf16>
    %cst = arith.constant dense<0.000000e+00> : vector<256x128xf32>
    %2 = tpu.matmul %0, %1, %cst {dimension_numbers = #tpu.dot_dimension_numbers<[1], [0], [0], [1], [0, 0, 1, 1], [], []>} : vector<256x128xbf16>, vector<128x128xbf16>, vector<256x128xf32> -> vector<256x128xf32>
    %c0_3 = arith.constant 0 : index
    %c0_4 = arith.constant 0 : index
    %3 = vector.load %arg4[%c0_3, %c0_4] : memref<1x128xf32, #tpu.memory_space<vmem>>, vector<1x128xf32>
    %4 = vector.broadcast %3 : vector<1x128xf32> to vector<256x128xf32>
    %5 = arith.addf %2, %4 : vector<256x128xf32>
    %cst_5 = arith.constant 0.000000e+00 : f32
    %6 = vector.broadcast %cst_5 : f32 to vector<256x128xf32>
    %7 = arith.maximumf %5, %6 : vector<256x128xf32>
    %8 = arith.truncf %7 : vector<256x128xf32> to vector<256x128xbf16>
    %c0_6 = arith.constant 0 : index
    %c0_7 = arith.constant 0 : index
    %9 = vector.load %arg5[%c0_6, %c0_7] : memref<128x128xbf16, #tpu.memory_space<vmem>>, vector<128x128xbf16>
    %cst_8 = arith.constant dense<0.000000e+00> : vector<256x128xf32>
    %10 = tpu.matmul %8, %9, %cst_8 {dimension_numbers = #tpu.dot_dimension_numbers<[1], [0], [0], [1], [0, 0, 1, 1], [], []>} : vector<256x128xbf16>, vector<128x128xbf16>, vector<256x128xf32> -> vector<256x128xf32>
    %c0_9 = arith.constant 0 : index
    %c0_10 = arith.constant 0 : index
    %11 = vector.load %arg6[%c0_9, %c0_10] : memref<1x128xf32, #tpu.memory_space<vmem>>, vector<1x128xf32>
    %12 = vector.broadcast %11 : vector<1x128xf32> to vector<256x128xf32>
    %13 = arith.addf %10, %12 : vector<256x128xf32>
    %14 = arith.truncf %13 : vector<256x128xf32> to vector<256x128xbf16>
    %c0_11 = arith.constant 0 : index
    %c0_12 = arith.constant 0 : index
    %15 = vector.load %arg7[%c0_11, %c0_12] : memref<128x128xbf16, #tpu.memory_space<vmem>>, vector<128x128xbf16>
    %cst_13 = arith.constant dense<0.000000e+00> : vector<256x128xf32>
    %16 = tpu.matmul %14, %15, %cst_13 {dimension_numbers = #tpu.dot_dimension_numbers<[1], [0], [0], [1], [0, 0, 1, 1], [], []>} : vector<256x128xbf16>, vector<128x128xbf16>, vector<256x128xf32> -> vector<256x128xf32>
    %c0_14 = arith.constant 0 : index
    %c0_15 = arith.constant 0 : index
    %17 = vector.load %arg8[%c0_14, %c0_15] : memref<1x128xf32, #tpu.memory_space<vmem>>, vector<1x128xf32>
    %18 = vector.broadcast %17 : vector<1x128xf32> to vector<256x128xf32>
    %19 = arith.addf %16, %18 : vector<256x128xf32>
    %cst_16 = arith.constant 0.000000e+00 : f32
    %20 = vector.broadcast %cst_16 : f32 to vector<256x128xf32>
    %21 = arith.maximumf %19, %20 : vector<256x128xf32>
    %22 = arith.truncf %21 : vector<256x128xf32> to vector<256x128xbf16>
    %c0_17 = arith.constant 0 : index
    %c0_18 = arith.constant 0 : index
    %23 = vector.load %arg9[%c0_17, %c0_18] : memref<128x128xbf16, #tpu.memory_space<vmem>>, vector<128x128xbf16>
    %cst_19 = arith.constant dense<0.000000e+00> : vector<256x128xf32>
    %24 = tpu.matmul %22, %23, %cst_19 {dimension_numbers = #tpu.dot_dimension_numbers<[1], [0], [0], [1], [0, 0, 1, 1], [], []>} : vector<256x128xbf16>, vector<128x128xbf16>, vector<256x128xf32> -> vector<256x128xf32>
    %c0_20 = arith.constant 0 : index
    %c0_21 = arith.constant 0 : index
    %25 = vector.load %arg10[%c0_20, %c0_21] : memref<1x128xf32, #tpu.memory_space<vmem>>, vector<1x128xf32>
    %26 = vector.broadcast %25 : vector<1x128xf32> to vector<256x128xf32>
    %27 = arith.addf %24, %26 : vector<256x128xf32>
    %28 = arith.truncf %27 : vector<256x128xf32> to vector<256x128xbf16>
    %c0_22 = arith.constant 0 : index
    %c0_23 = arith.constant 0 : index
    %29 = vector.load %arg15[%c0_22, %c0_23] : memref<256x128xbf16, #tpu.memory_space<vmem>>, vector<256x128xbf16>
    tpu.vector_store %arg15[%c0_22, %c0_23], %28 {strides = array<i32>} : memref<256x128xbf16, #tpu.memory_space<vmem>>, vector<256x128xbf16>,
    %c0_24 = arith.constant 0 : index
    %c0_25 = arith.constant 0 : index
    %30 = vector.load %arg2[%c0_24, %c0_25] : memref<256x128xbf16, #tpu.memory_space<vmem>>, vector<256x128xbf16>
    %c0_26 = arith.constant 0 : index
    %c0_27 = arith.constant 0 : index
    %31 = vector.load %arg11[%c0_26, %c0_27] : memref<128x128xbf16, #tpu.memory_space<vmem>>, vector<128x128xbf16>
    %cst_28 = arith.constant dense<0.000000e+00> : vector<256x128xf32>
    %32 = tpu.matmul %30, %31, %cst_28 {dimension_numbers = #tpu.dot_dimension_numbers<[1], [0], [0], [1], [0, 0, 1, 1], [], []>} : vector<256x128xbf16>, vector<128x128xbf16>, vector<256x128xf32> -> vector<256x128xf32>
    %c0_29 = arith.constant 0 : index
    %c0_30 = arith.constant 0 : index
    %33 = vector.load %arg12[%c0_29, %c0_30] : memref<1x128xf32, #tpu.memory_space<vmem>>, vector<1x128xf32>
    %34 = vector.broadcast %33 : vector<1x128xf32> to vector<256x128xf32>
    %35 = arith.addf %32, %34 : vector<256x128xf32>
    %cst_31 = arith.constant 0.000000e+00 : f32
    %36 = vector.broadcast %cst_31 : f32 to vector<256x128xf32>
    %37 = arith.maximumf %35, %36 : vector<256x128xf32>
    %38 = arith.truncf %37 : vector<256x128xf32> to vector<256x128xbf16>
    %c0_32 = arith.constant 0 : index
    %c0_33 = arith.constant 0 : index
    %39 = vector.load %arg13[%c0_32, %c0_33] : memref<128x128xbf16, #tpu.memory_space<vmem>>, vector<128x128xbf16>
    %cst_34 = arith.constant dense<0.000000e+00> : vector<256x128xf32>
    %40 = tpu.matmul %38, %39, %cst_34 {dimension_numbers = #tpu.dot_dimension_numbers<[1], [0], [0], [1], [0, 0, 1, 1], [], []>} : vector<256x128xbf16>, vector<128x128xbf16>, vector<256x128xf32> -> vector<256x128xf32>
    %c0_35 = arith.constant 0 : index
    %c0_36 = arith.constant 0 : index
    %41 = vector.load %arg14[%c0_35, %c0_36] : memref<1x128xf32, #tpu.memory_space<vmem>>, vector<1x128xf32>
    %42 = vector.broadcast %41 : vector<1x128xf32> to vector<256x128xf32>
    %43 = arith.addf %40, %42 : vector<256x128xf32>
    %44 = arith.truncf %43 : vector<256x128xf32> to vector<256x128xbf16>
    %c0_37 = arith.constant 0 : index
    %c0_38 = arith.constant 0 : index
    %45 = vector.load %arg16[%c0_37, %c0_38] : memref<256x128xbf16, #tpu.memory_space<vmem>>, vector<256x128xbf16>
    tpu.vector_store %arg16[%c0_37, %c0_38], %44 {strides = array<i32>} : memref<256x128xbf16, #tpu.memory_space<vmem>>, vector<256x128xbf16>,
    return
  }
  func.func @transform_0(%arg0: i32) -> (i32, i32) {
    %c0_i32 = arith.constant 0 : i32
    %c0_i32_0 = arith.constant 0 : i32
    return %arg0, %c0_i32 : i32, i32
  }
  func.func @transform_1(%arg0: i32) -> (i32, i32) {
    %c0_i32 = arith.constant 0 : i32
    %c0_i32_0 = arith.constant 0 : i32
    return %arg0, %c0_i32 : i32, i32
  }
  func.func @transform_2(%arg0: i32) -> (i32, i32) {
    %c0_i32 = arith.constant 0 : i32
    %c0_i32_0 = arith.constant 0 : i32
    %c0_i32_1 = arith.constant 0 : i32
    return %c0_i32, %c0_i32_0 : i32, i32
  }
  func.func @transform_3(%arg0: i32) -> (i32, i32) {
    %c0_i32 = arith.constant 0 : i32
    %c0_i32_0 = arith.constant 0 : i32
    %c0_i32_1 = arith.constant 0 : i32
    return %c0_i32, %c0_i32_0 : i32, i32
  }
  func.func @transform_4(%arg0: i32) -> (i32, i32) {
    %c0_i32 = arith.constant 0 : i32
    %c0_i32_0 = arith.constant 0 : i32
    %c0_i32_1 = arith.constant 0 : i32
    return %c0_i32, %c0_i32_0 : i32, i32
  }
  func.func @transform_5(%arg0: i32) -> (i32, i32) {
    %c0_i32 = arith.constant 0 : i32
    %c0_i32_0 = arith.constant 0 : i32
    %c0_i32_1 = arith.constant 0 : i32
    return %c0_i32, %c0_i32_0 : i32, i32
  }
  func.func @transform_6(%arg0: i32) -> (i32, i32) {
    %c0_i32 = arith.constant 0 : i32
    %c0_i32_0 = arith.constant 0 : i32
    %c0_i32_1 = arith.constant 0 : i32
    return %c0_i32, %c0_i32_0 : i32, i32
  }
  func.func @transform_7(%arg0: i32) -> (i32, i32) {
    %c0_i32 = arith.constant 0 : i32
    %c0_i32_0 = arith.constant 0 : i32
    %c0_i32_1 = arith.constant 0 : i32
    return %c0_i32, %c0_i32_0 : i32, i32
  }
  func.func @transform_8(%arg0: i32) -> (i32, i32) {
    %c0_i32 = arith.constant 0 : i32
    %c0_i32_0 = arith.constant 0 : i32
    %c0_i32_1 = arith.constant 0 : i32
    return %c0_i32, %c0_i32_0 : i32, i32
  }
  func.func @transform_9(%arg0: i32) -> (i32, i32) {
    %c0_i32 = arith.constant 0 : i32
    %c0_i32_0 = arith.constant 0 : i32
    %c0_i32_1 = arith.constant 0 : i32
    return %c0_i32, %c0_i32_0 : i32, i32
  }
  func.func @transform_10(%arg0: i32) -> (i32, i32) {
    %c0_i32 = arith.constant 0 : i32
    %c0_i32_0 = arith.constant 0 : i32
    %c0_i32_1 = arith.constant 0 : i32
    return %c0_i32, %c0_i32_0 : i32, i32
  }
  func.func @transform_11(%arg0: i32) -> (i32, i32) {
    %c0_i32 = arith.constant 0 : i32
    %c0_i32_0 = arith.constant 0 : i32
    %c0_i32_1 = arith.constant 0 : i32
    return %c0_i32, %c0_i32_0 : i32, i32
  }
  func.func @transform_12(%arg0: i32) -> (i32, i32) {
    %c0_i32 = arith.constant 0 : i32
    %c0_i32_0 = arith.constant 0 : i32
    %c0_i32_1 = arith.constant 0 : i32
    return %c0_i32, %c0_i32_0 : i32, i32
  }
  func.func @transform_13(%arg0: i32) -> (i32, i32) {
    %c0_i32 = arith.constant 0 : i32
    %c0_i32_0 = arith.constant 0 : i32
    %c0_i32_1 = arith.constant 0 : i32
    return %c0_i32, %c0_i32_0 : i32, i32
  }
  func.func @transform_14(%arg0: i32) -> (i32, i32) {
    %c0_i32 = arith.constant 0 : i32
    %c0_i32_0 = arith.constant 0 : i32
    return %arg0, %c0_i32 : i32, i32
  }
  func.func @transform_15(%arg0: i32) -> (i32, i32) {
    %c0_i32 = arith.constant 0 : i32
    %c0_i32_0 = arith.constant 0 : i32
    return %arg0, %c0_i32 : i32, i32
  }
}

</mosaic_0001>

<llo_original>
// kernel: tpu_custom_call.1
$region0: #{tpu_custom_call.1}
  #allocation0 [shape = 'u32[]', space=smem, size = 0x4, offset = 0x4, fixed_abs, tag = 'smem constant byte address 0x4 - core index']
  #allocation1 [shape = 'u32[144,128]{1,0:T(1,128)}', space=vmem, size = 0x12000, scoped, tag = 'internal scratch']
  %s0 = inlined_call_operand.hbm [shape: bf16[1024,128], index: 0, kind: input, shape index: {}]
  %s1 = inlined_call_operand.hbm [shape: bf16[1024,128], index: 1, kind: input, shape index: {}]
  %s2 = inlined_call_operand.hbm [shape: bf16[128,128], index: 2, kind: input, shape index: {}]
  %s3 = inlined_call_operand.vmem [shape: f32[1,128], index: 3, kind: input, shape index: {}]
  %s4 = inlined_call_operand.hbm [shape: bf16[128,128], index: 4, kind: input, shape index: {}]
  %s5 = inlined_call_operand.vmem [shape: f32[1,128], index: 5, kind: input, shape index: {}]
  %s6 = inlined_call_operand.hbm [shape: bf16[128,128], index: 6, kind: input, shape index: {}]
  %s7 = inlined_call_operand.vmem [shape: f32[1,128], index: 7, kind: input, shape index: {}]
  %s8 = inlined_call_operand.hbm [shape: bf16[128,128], index: 8, kind: input, shape index: {}]
  %s9 = inlined_call_operand.vmem [shape: f32[1,128], index: 9, kind: input, shape index: {}]
  %s10 = inlined_call_operand.hbm [shape: bf16[128,128], index: 10, kind: input, shape index: {}]
  %s11 = inlined_call_operand.vmem [shape: f32[1,128], index: 11, kind: input, shape index: {}]
  %s12 = inlined_call_operand.hbm [shape: bf16[128,128], index: 12, kind: input, shape index: {}]
  %s13 = inlined_call_operand.vmem [shape: f32[1,128], index: 13, kind: input, shape index: {}]
  %s14 = inlined_call_operand.hbm [shape: bf16[1024,128], index: 14, kind: output, shape index: {0}]
  %s15 = inlined_call_operand.hbm [shape: bf16[1024,128], index: 15, kind: output, shape index: {1}]
  %16 = xla_tuple %s14, %s15
  %s17 = sld [smem:[#allocation0]]
  $region129: #{tpu_custom_call.1} parent=0
    _
  %s19 = ssub.s32 1, %s17
  %s20 = scalar_select 0, %s19, %s17
  $region1: #{tpu_custom_call.1} parent=0
    #allocation2 [shape = 'u8[131072]{0}', space=vmem, size = 0x20000, scoped, tag = 'input window, operand 0']
    #allocation3 [shape = 's32[2]{0}', space=sflag, size = 0x8, scoped, tag = 'scoped memory for tpu_custom_call.1']
    #allocation4 [shape = 's32[2]{0}', space=sflag, size = 0x8, scoped, tag = 'scoped memory for tpu_custom_call.1']
    #allocation5 [shape = 'u8[131072]{0}', space=vmem, size = 0x20000, scoped, tag = 'input window, operand 1']
    #allocation6 [shape = 's32[2]{0}', space=sflag, size = 0x8, scoped, tag = 'scoped memory for tpu_custom_call.1']
    #allocation7 [shape = 'u8[32768]{0}', space=vmem, size = 0x8000, scoped, tag = 'input window, operand 2, single buffered']
    #allocation8 [shape = 'u8[32768]{0}', space=vmem, size = 0x8000, scoped, tag = 'input window, operand 4, single buffered']
    #allocation9 [shape = 's32[1]{0}', space=sflag, size = 0x4, scoped, tag = 'scoped memory for tpu_custom_call.1']
    #allocation10 [shape = 'u8[32768]{0}', space=vmem, size = 0x8000, scoped, tag = 'input window, operand 6, single buffered']
    #allocation11 [shape = 'u8[32768]{0}', space=vmem, size = 0x8000, scoped, tag = 'input window, operand 8, single buffered']
    #allocation12 [shape = 's32[1]{0}', space=sflag, size = 0x4, scoped, tag = 'scoped memory for tpu_custom_call.1']
    #allocation13 [shape = 'u8[32768]{0}', space=vmem, size = 0x8000, scoped, tag = 'input window, operand 10, single buffered']
    #allocation14 [shape = 'u8[32768]{0}', space=vmem, size = 0x8000, scoped, tag = 'input window, operand 12, single buffered']
    #allocation15 [shape = 's32[1]{0}', space=sflag, size = 0x4, scoped, tag = 'scoped memory for tpu_custom_call.1']
    #allocation16 [shape = 'u8[131072]{0}', space=vmem, size = 0x20000, scoped, tag = 'output window, operand 0']
    #allocation17 [shape = 'u8[131072]{0}', space=vmem, size = 0x20000, scoped, tag = 'output window, operand 1']
    #allocation18 [shape = 's32[2]{0}', space=sflag, size = 0x8, scoped, tag = 'scoped memory for tpu_custom_call.1']
    %21 = vsyncpa [#allocation3], 0
    %s22 = scalar_lea.sflag [#allocation3], 1
    %23 = vsyncpa %s22, 0
    %24 = vsyncpa [#allocation6], 0
    %s25 = scalar_lea.sflag [#allocation6], 1
    %26 = vsyncpa %s25, 0
    %27 = vsyncpa [#allocation9], 0
    %28 = vsyncpa [#allocation12], 0
    %29 = vsyncpa [#allocation15], 0
    %30 = vsyncpa [#allocation4], 0
    %s31 = scalar_lea.sflag [#allocation4], 1
    %32 = vsyncpa %s31, 0
    %33 = vsyncpa [#allocation18], 0
    %s34 = scalar_lea.sflag [#allocation18], 1
    %35 = vsyncpa %s34, 0
    loop: start=0, step=1, limit=6
    $region2: #{tpu_custom_call.1} parent=1 // loop_pre_header
      _
    $region3: #{tpu_custom_call.1} parent=1 // loop_header
      %s37 = sphi 0, %s41
      %p38 = scmp.ge.s32.totalorder %s37, 6
      %s47 = sphi 0, %s49
      %s50 = sphi 0, %s47
      %s51 = sphi 0, %s50
      %s67 = sphi 0, %s51
      %s73 = sphi 0, %s75
      %s76 = sphi 0, %s73
      %s77 = sphi 0, %s76
      %s93 = sphi 0, %s77
      %s97 = sphi 0, %s97
      %s99 = sphi 0, %s97
      %s100 = sphi 0, %s99
      %s114 = sphi 0, %s100
      %s118 = sphi 0, %s118
      %s120 = sphi 0, %s118
      %s121 = sphi 0, %s120
      %s135 = sphi 0, %s121
      %s139 = sphi 0, %s139
      %s141 = sphi 0, %s139
      %s142 = sphi 0, %s141
      %s156 = sphi 0, %s142
      %s160 = sphi 0, %s160
      %s162 = sphi 0, %s160
      %s163 = sphi 0, %s162
      %s177 = sphi 0, %s163
      %s181 = sphi 0, %s181
      %s183 = sphi 0, %s181
      %s184 = sphi 0, %s183
      %s198 = sphi 0, %s184
      %s202 = sphi 0, %s202
      %s204 = sphi 0, %s202
      %s205 = sphi 0, %s204
      %s219 = sphi 0, %s205
      %s223 = sphi 0, %s223
      %s225 = sphi 0, %s223
      %s226 = sphi 0, %s225
      %s240 = sphi 0, %s226
      %s244 = sphi 0, %s244
      %s246 = sphi 0, %s244
      %s247 = sphi 0, %s246
      %s261 = sphi 0, %s247
      %s265 = sphi 0, %s265
      %s267 = sphi 0, %s265
      %s268 = sphi 0, %s267
      %s282 = sphi 0, %s268
      %s286 = sphi 0, %s286
      %s288 = sphi 0, %s286
      %s289 = sphi 0, %s288
      %s303 = sphi 0, %s289
      %s307 = sphi 0, %s307
      %s309 = sphi 0, %s307
      %s310 = sphi 0, %s309
      %s324 = sphi 0, %s310
      %s328 = sphi 0, %s328
      %s330 = sphi 0, %s328
      %s331 = sphi 0, %s330
      %s345 = sphi 0, %s331
      %s351 = sphi 0, %s353
      %s354 = sphi 0, %s351
      %s355 = sphi 0, %s354
      %s371 = sphi 0, %s355
      %s377 = sphi 0, %s379
      %s380 = sphi 0, %s377
      %s381 = sphi 0, %s380
      %s397 = sphi 0, %s381
    $region4: #{tpu_custom_call.1} parent=1 // loop_header_branch
      %40 = sbr.rel (%p38) target = $region8
    $region5: #{tpu_custom_call.1} parent=1 // loop_body
      %s42 = ssub.s32 %s37, 1
      %s43 = ssub.s32 %s37, 2
      %s44 = sadd.s32 %s37, 1
      %s45 = ssub.s32 %s37, %s44
      %p46 = scmp.eq.s32.totalorder %s45, 0
      %s48 = sadd.s32 %s47, 1
      %s49 = scalar_select %p46, %s47, %s48
      %p52 = pneg %p46
      %p53 = scmp.eq.s32.totalorder %s37, 3
      %p54 = por %p52, %p53
      %p55 = scmp.ne.s32.totalorder %s47, %s50
      %p56 = scmp.eq.s32.totalorder %s37, 0
      %p57 = por %p55, %p56
      %p58 = scmp.ne.s32.totalorder %s47, %s50
      %p59 = scmp.eq.s32.totalorder %s42, 3
      %p60 = por %p58, %p59
      %p61 = scmp.ne.s32.totalorder %s50, %s51
      %p62 = scmp.eq.s32.totalorder %s42, 0
      %p63 = por %p61, %p62
      %p64 = scmp.ne.s32.totalorder %s50, %s51
      %p65 = scmp.eq.s32.totalorder %s43, 3
      %p66 = por %p64, %p65
      %p68 = scmp.ne.s32.totalorder %s51, %s67
      %p69 = scmp.eq.s32.totalorder %s43, 0
      %p70 = por %p68, %p69
      %s71 = ssub.s32 %s37, %s44
      %p72 = scmp.eq.s32.totalorder %s71, 0
      %s74 = sadd.s32 %s73, 1
      %s75 = scalar_select %p72, %s73, %s74
      %p78 = pneg %p72
      %p79 = scmp.eq.s32.totalorder %s37, 3
      %p80 = por %p78, %p79
      %p81 = scmp.ne.s32.totalorder %s73, %s76
      %p82 = scmp.eq.s32.totalorder %s37, 0
      %p83 = por %p81, %p82
      %p84 = scmp.ne.s32.totalorder %s73, %s76
      %p85 = scmp.eq.s32.totalorder %s42, 3
      %p86 = por %p84, %p85
      %p87 = scmp.ne.s32.totalorder %s76, %s77
      %p88 = scmp.eq.s32.totalorder %s42, 0
      %p89 = por %p87, %p88
      %p90 = scmp.ne.s32.totalorder %s76, %s77
      %p91 = scmp.eq.s32.totalorder %s43, 3
      %p92 = por %p90, %p91
      %p94 = scmp.ne.s32.totalorder %s77, %s93
      %p95 = scmp.eq.s32.totalorder %s43, 0
      %p96 = por %p94, %p95
      %s98 = sadd.s32 %s97, 1
      %p101 = scmp.eq.s32.totalorder %s37, 3
      %p102 = scmp.ne.s32.totalorder %s97, %s99
      %p103 = scmp.eq.s32.totalorder %s37, 0
      %p104 = por %p102, %p103
      %p105 = scmp.ne.s32.totalorder %s97, %s99
      %p106 = scmp.eq.s32.totalorder %s42, 3
      %p107 = por %p105, %p106
      %p108 = scmp.ne.s32.totalorder %s99, %s100
      %p109 = scmp.eq.s32.totalorder %s42, 0
      %p110 = por %p108, %p109
      %p111 = scmp.ne.s32.totalorder %s99, %s100
      %p112 = scmp.eq.s32.totalorder %s43, 3
      %p113 = por %p111, %p112
      %p115 = scmp.ne.s32.totalorder %s100, %s114
      %p116 = scmp.eq.s32.totalorder %s43, 0
      %p117 = por %p115, %p116
      %s119 = sadd.s32 %s118, 1
      %p122 = scmp.eq.s32.totalorder %s37, 3
      %p123 = scmp.ne.s32.totalorder %s118, %s120
      %p124 = scmp.eq.s32.totalorder %s37, 0
      %p125 = por %p123, %p124
      %p126 = scmp.ne.s32.totalorder %s118, %s120
      %p127 = scmp.eq.s32.totalorder %s42, 3
      %p128 = por %p126, %p127
      %p129 = scmp.ne.s32.totalorder %s120, %s121
      %p130 = scmp.eq.s32.totalorder %s42, 0
      %p131 = por %p129, %p130
      %p132 = scmp.ne.s32.totalorder %s120, %s121
      %p133 = scmp.eq.s32.totalorder %s43, 3
      %p134 = por %p132, %p133
      %p136 = scmp.ne.s32.totalorder %s121, %s135
      %p137 = scmp.eq.s32.totalorder %s43, 0
      %p138 = por %p136, %p137
      %s140 = sadd.s32 %s139, 1
      %p143 = scmp.eq.s32.totalorder %s37, 3
      %p144 = scmp.ne.s32.totalorder %s139, %s141
      %p145 = scmp.eq.s32.totalorder %s37, 0
      %p146 = por %p144, %p145
      %p147 = scmp.ne.s32.totalorder %s139, %s141
      %p148 = scmp.eq.s32.totalorder %s42, 3
      %p149 = por %p147, %p148
      %p150 = scmp.ne.s32.totalorder %s141, %s142
      %p151 = scmp.eq.s32.totalorder %s42, 0
      %p152 = por %p150, %p151
      %p153 = scmp.ne.s32.totalorder %s141, %s142
      %p154 = scmp.eq.s32.totalorder %s43, 3
      %p155 = por %p153, %p154
      %p157 = scmp.ne.s32.totalorder %s142, %s156
      %p158 = scmp.eq.s32.totalorder %s43, 0
      %p159 = por %p157, %p158
      %s161 = sadd.s32 %s160, 1
      %p164 = scmp.eq.s32.totalorder %s37, 3
      %p165 = scmp.ne.s32.totalorder %s160, %s162
      %p166 = scmp.eq.s32.totalorder %s37, 0
      %p167 = por %p165, %p166
      %p168 = scmp.ne.s32.totalorder %s160, %s162
      %p169 = scmp.eq.s32.totalorder %s42, 3
      %p170 = por %p168, %p169
      %p171 = scmp.ne.s32.totalorder %s162, %s163
      %p172 = scmp.eq.s32.totalorder %s42, 0
      %p173 = por %p171, %p172
      %p174 = scmp.ne.s32.totalorder %s162, %s163
      %p175 = scmp.eq.s32.totalorder %s43, 3
      %p176 = por %p174, %p175
      %p178 = scmp.ne.s32.totalorder %s163, %s177
      %p179 = scmp.eq.s32.totalorder %s43, 0
      %p180 = por %p178, %p179
      %s182 = sadd.s32 %s181, 1
      %p185 = scmp.eq.s32.totalorder %s37, 3
      %p186 = scmp.ne.s32.totalorder %s181, %s183
      %p187 = scmp.eq.s32.totalorder %s37, 0
      %p188 = por %p186, %p187
      %p189 = scmp.ne.s32.totalorder %s181, %s183
      %p190 = scmp.eq.s32.totalorder %s42, 3
      %p191 = por %p189, %p190
      %p192 = scmp.ne.s32.totalorder %s183, %s184
      %p193 = scmp.eq.s32.totalorder %s42, 0
      %p194 = por %p192, %p193
      %p195 = scmp.ne.s32.totalorder %s183, %s184
      %p196 = scmp.eq.s32.totalorder %s43, 3
      %p197 = por %p195, %p196
      %p199 = scmp.ne.s32.totalorder %s184, %s198
      %p200 = scmp.eq.s32.totalorder %s43, 0
      %p201 = por %p199, %p200
      %s203 = sadd.s32 %s202, 1
      %p206 = scmp.eq.s32.totalorder %s37, 3
      %p207 = scmp.ne.s32.totalorder %s202, %s204
      %p208 = scmp.eq.s32.totalorder %s37, 0
      %p209 = por %p207, %p208
      %p210 = scmp.ne.s32.totalorder %s202, %s204
      %p211 = scmp.eq.s32.totalorder %s42, 3
      %p212 = por %p210, %p211
      %p213 = scmp.ne.s32.totalorder %s204, %s205
      %p214 = scmp.eq.s32.totalorder %s42, 0
      %p215 = por %p213, %p214
      %p216 = scmp.ne.s32.totalorder %s204, %s205
      %p217 = scmp.eq.s32.totalorder %s43, 3
      %p218 = por %p216, %p217
      %p220 = scmp.ne.s32.totalorder %s205, %s219
      %p221 = scmp.eq.s32.totalorder %s43, 0
      %p222 = por %p220, %p221
      %s224 = sadd.s32 %s223, 1
      %p227 = scmp.eq.s32.totalorder %s37, 3
      %p228 = scmp.ne.s32.totalorder %s223, %s225
      %p229 = scmp.eq.s32.totalorder %s37, 0
      %p230 = por %p228, %p229
      %p231 = scmp.ne.s32.totalorder %s223, %s225
      %p232 = scmp.eq.s32.totalorder %s42, 3
      %p233 = por %p231, %p232
      %p234 = scmp.ne.s32.totalorder %s225, %s226
      %p235 = scmp.eq.s32.totalorder %s42, 0
      %p236 = por %p234, %p235
      %p237 = scmp.ne.s32.totalorder %s225, %s226
      %p238 = scmp.eq.s32.totalorder %s43, 3
      %p239 = por %p237, %p238
      %p241 = scmp.ne.s32.totalorder %s226, %s240
      %p242 = scmp.eq.s32.totalorder %s43, 0
      %p243 = por %p241, %p242
      %s245 = sadd.s32 %s244, 1
      %p248 = scmp.eq.s32.totalorder %s37, 3
      %p249 = scmp.ne.s32.totalorder %s244, %s246
      %p250 = scmp.eq.s32.totalorder %s37, 0
      %p251 = por %p249, %p250
      %p252 = scmp.ne.s32.totalorder %s244, %s246
      %p253 = scmp.eq.s32.totalorder %s42, 3
      %p254 = por %p252, %p253
      %p255 = scmp.ne.s32.totalorder %s246, %s247
      %p256 = scmp.eq.s32.totalorder %s42, 0
      %p257 = por %p255, %p256
      %p258 = scmp.ne.s32.totalorder %s246, %s247
      %p259 = scmp.eq.s32.totalorder %s43, 3
      %p260 = por %p258, %p259
      %p262 = scmp.ne.s32.totalorder %s247, %s261
      %p263 = scmp.eq.s32.totalorder %s43, 0
      %p264 = por %p262, %p263
      %s266 = sadd.s32 %s265, 1
      %p269 = scmp.eq.s32.totalorder %s37, 3
      %p270 = scmp.ne.s32.totalorder %s265, %s267
      %p271 = scmp.eq.s32.totalorder %s37, 0
      %p272 = por %p270, %p271
      %p273 = scmp.ne.s32.totalorder %s265, %s267
      %p274 = scmp.eq.s32.totalorder %s42, 3
      %p275 = por %p273, %p274
      %p276 = scmp.ne.s32.totalorder %s267, %s268
      %p277 = scmp.eq.s32.totalorder %s42, 0
      %p278 = por %p276, %p277
      %p279 = scmp.ne.s32.totalorder %s267, %s268
      %p280 = scmp.eq.s32.totalorder %s43, 3
      %p281 = por %p279, %p280
      %p283 = scmp.ne.s32.totalorder %s268, %s282
      %p284 = scmp.eq.s32.totalorder %s43, 0
      %p285 = por %p283, %p284
      %s287 = sadd.s32 %s286, 1
      %p290 = scmp.eq.s32.totalorder %s37, 3
      %p291 = scmp.ne.s32.totalorder %s286, %s288
      %p292 = scmp.eq.s32.totalorder %s37, 0
      %p293 = por %p291, %p292
      %p294 = scmp.ne.s32.totalorder %s286, %s288
      %p295 = scmp.eq.s32.totalorder %s42, 3
      %p296 = por %p294, %p295
      %p297 = scmp.ne.s32.totalorder %s288, %s289
      %p298 = scmp.eq.s32.totalorder %s42, 0
      %p299 = por %p297, %p298
      %p300 = scmp.ne.s32.totalorder %s288, %s289
      %p301 = scmp.eq.s32.totalorder %s43, 3
      %p302 = por %p300, %p301
      %p304 = scmp.ne.s32.totalorder %s289, %s303
      %p305 = scmp.eq.s32.totalorder %s43, 0
      %p306 = por %p304, %p305
      %s308 = sadd.s32 %s307, 1
      %p311 = scmp.eq.s32.totalorder %s37, 3
      %p312 = scmp.ne.s32.totalorder %s307, %s309
      %p313 = scmp.eq.s32.totalorder %s37, 0
      %p314 = por %p312, %p313
      %p315 = scmp.ne.s32.totalorder %s307, %s309
      %p316 = scmp.eq.s32.totalorder %s42, 3
      %p317 = por %p315, %p316
      %p318 = scmp.ne.s32.totalorder %s309, %s310
      %p319 = scmp.eq.s32.totalorder %s42, 0
      %p320 = por %p318, %p319
      %p321 = scmp.ne.s32.totalorder %s309, %s310
      %p322 = scmp.eq.s32.totalorder %s43, 3
      %p323 = por %p321, %p322
      %p325 = scmp.ne.s32.totalorder %s310, %s324
      %p326 = scmp.eq.s32.totalorder %s43, 0
      %p327 = por %p325, %p326
      %s329 = sadd.s32 %s328, 1
      %p332 = scmp.eq.s32.totalorder %s37, 3
      %p333 = scmp.ne.s32.totalorder %s328, %s330
      %p334 = scmp.eq.s32.totalorder %s37, 0
      %p335 = por %p333, %p334
      %p336 = scmp.ne.s32.totalorder %s328, %s330
      %p337 = scmp.eq.s32.totalorder %s42, 3
      %p338 = por %p336, %p337
      %p339 = scmp.ne.s32.totalorder %s330, %s331
      %p340 = scmp.eq.s32.totalorder %s42, 0
      %p341 = por %p339, %p340
      %p342 = scmp.ne.s32.totalorder %s330, %s331
      %p343 = scmp.eq.s32.totalorder %s43, 3
      %p344 = por %p342, %p343
      %p346 = scmp.ne.s32.totalorder %s331, %s345
      %p347 = scmp.eq.s32.totalorder %s43, 0
      %p348 = por %p346, %p347
      %s349 = ssub.s32 %s37, %s44
      %p350 = scmp.eq.s32.totalorder %s349, 0
      %s352 = sadd.s32 %s351, 1
      %s353 = scalar_select %p350, %s351, %s352
      %p356 = pneg %p350
      %p357 = scmp.eq.s32.totalorder %s37, 3
      %p358 = por %p356, %p357
      %p359 = scmp.ne.s32.totalorder %s351, %s354
      %p360 = scmp.eq.s32.totalorder %s37, 0
      %p361 = por %p359, %p360
      %p362 = scmp.ne.s32.totalorder %s351, %s354
      %p363 = scmp.eq.s32.totalorder %s42, 3
      %p364 = por %p362, %p363
      %p365 = scmp.ne.s32.totalorder %s354, %s355
      %p366 = scmp.eq.s32.totalorder %s42, 0
      %p367 = por %p365, %p366
      %p368 = scmp.ne.s32.totalorder %s354, %s355
      %p369 = scmp.eq.s32.totalorder %s43, 3
      %p370 = por %p368, %p369
      %p372 = scmp.ne.s32.totalorder %s355, %s371
      %p373 = scmp.eq.s32.totalorder %s43, 0
      %p374 = por %p372, %p373
      %s375 = ssub.s32 %s37, %s44
      %p376 = scmp.eq.s32.totalorder %s375, 0
      %s378 = sadd.s32 %s377, 1
      %s379 = scalar_select %p376, %s377, %s378
      %p382 = pneg %p376
      %p383 = scmp.eq.s32.totalorder %s37, 3
      %p384 = por %p382, %p383
      %p385 = scmp.ne.s32.totalorder %s377, %s380
      %p386 = scmp.eq.s32.totalorder %s37, 0
      %p387 = por %p385, %p386
      %p388 = scmp.ne.s32.totalorder %s377, %s380
      %p389 = scmp.eq.s32.totalorder %s42, 3
      %p390 = por %p388, %p389
      %p391 = scmp.ne.s32.totalorder %s380, %s381
      %p392 = scmp.eq.s32.totalorder %s42, 0
      %p393 = por %p391, %p392
      %p394 = scmp.ne.s32.totalorder %s380, %s381
      %p395 = scmp.eq.s32.totalorder %s43, 3
      %p396 = por %p394, %p395
      %p398 = scmp.ne.s32.totalorder %s381, %s397
      %p399 = scmp.eq.s32.totalorder %s43, 0
      %p400 = por %p398, %p399
      %p401 = scmp.le.s32.totalorder 1, %s37
      %p402 = scmp.lt.s32.totalorder %s37, 5
      %p403 = pnand %p401, %p402
      %p404 = pneg %p403
      // Predicated region
      $region9: #{tpu_custom_call.1} parent=5 // pred_check
        _
      $region10: #{tpu_custom_call.1} parent=5 // pred_check_branch
        %406 = sbr.rel (%p403) target = $region12
      $region11: #{tpu_custom_call.1} parent=5 // pred_region
        %s407 = ssub.s32 %s37, 1
        // Predicated region
        $region13: #{tpu_custom_call.1} parent=11 // pred_check
          %p408 = pneg %p110
        $region14: #{tpu_custom_call.1} parent=11 // pred_check_branch
          %410 = sbr.rel (%p408) target = $region16
        $region15: #{tpu_custom_call.1} parent=11 // pred_region
          %s412 = ssub.s32 1024, 1024
          %413 = vsyncadd [#allocation6], %s412
          %s414 = sshll.u32 [#allocation7], 4
          %s415 = int_to_ptr.vmem [resolvable:$true] %s414
          %420 = dma.hbm_to_vmem [thread:$0]  %s2, 1024, %s415, [#allocation6], 64, 64, 4
        $region16: #{tpu_custom_call.1} parent=11 // pred_fallthru
          _
        // Predicated region
        $region17: #{tpu_custom_call.1} parent=11 // pred_check
          %p421 = pneg %p131
        $region18: #{tpu_custom_call.1} parent=11 // pred_check_branch
          %423 = sbr.rel (%p421) target = $region20
        $region19: #{tpu_custom_call.1} parent=11 // pred_region
          _
        $region20: #{tpu_custom_call.1} parent=11 // pred_fallthru
          _
        // Predicated region
        $region21: #{tpu_custom_call.1} parent=11 // pred_check
          %p424 = pneg %p152
        $region22: #{tpu_custom_call.1} parent=11 // pred_check_branch
          %426 = sbr.rel (%p424) target = $region24
        $region23: #{tpu_custom_call.1} parent=11 // pred_region
          %s428 = ssub.s32 1024, 1024
          %429 = vsyncadd [#allocation9], %s428
          %s430 = sshll.u32 [#allocation8], 4
          %s431 = int_to_ptr.vmem [resolvable:$true] %s430
          %436 = dma.hbm_to_vmem [thread:$0]  %s4, 1024, %s431, [#allocation9], 64, 64, 4
        $region24: #{tpu_custom_call.1} parent=11 // pred_fallthru
          _
        // Predicated region
        $region25: #{tpu_custom_call.1} parent=11 // pred_check
          %p437 = pneg %p173
        $region26: #{tpu_custom_call.1} parent=11 // pred_check_branch
          %439 = sbr.rel (%p437) target = $region28
        $region27: #{tpu_custom_call.1} parent=11 // pred_region
          _
        $region28: #{tpu_custom_call.1} parent=11 // pred_fallthru
          _
        // Predicated region
        $region29: #{tpu_custom_call.1} parent=11 // pred_check
          %p440 = pneg %p194
        $region30: #{tpu_custom_call.1} parent=11 // pred_check_branch
          %442 = sbr.rel (%p440) target = $region32
        $region31: #{tpu_custom_call.1} parent=11 // pred_region
          %s444 = ssub.s32 1024, 1024
          %445 = vsyncadd [#allocation9], %s444
          %s446 = sshll.u32 [#allocation10], 4
          %s447 = int_to_ptr.vmem [resolvable:$true] %s446
          %452 = dma.hbm_to_vmem [thread:$0]  %s6, 1024, %s447, [#allocation9], 64, 64, 4
        $region32: #{tpu_custom_call.1} parent=11 // pred_fallthru
          _
        // Predicated region
        $region33: #{tpu_custom_call.1} parent=11 // pred_check
          %p453 = pneg %p215
        $region34: #{tpu_custom_call.1} parent=11 // pred_check_branch
          %455 = sbr.rel (%p453) target = $region36
        $region35: #{tpu_custom_call.1} parent=11 // pred_region
          _
        $region36: #{tpu_custom_call.1} parent=11 // pred_fallthru
          _
        // Predicated region
        $region37: #{tpu_custom_call.1} parent=11 // pred_check
          %p456 = pneg %p236
        $region38: #{tpu_custom_call.1} parent=11 // pred_check_branch
          %458 = sbr.rel (%p456) target = $region40
        $region39: #{tpu_custom_call.1} parent=11 // pred_region
          %s460 = ssub.s32 1024, 1024
          %461 = vsyncadd [#allocation12], %s460
          %s462 = sshll.u32 [#allocation11], 4
          %s463 = int_to_ptr.vmem [resolvable:$true] %s462
          %468 = dma.hbm_to_vmem [thread:$0]  %s8, 1024, %s463, [#allocation12], 64, 64, 4
        $region40: #{tpu_custom_call.1} parent=11 // pred_fallthru
          _
        // Predicated region
        $region41: #{tpu_custom_call.1} parent=11 // pred_check
          %p469 = pneg %p257
        $region42: #{tpu_custom_call.1} parent=11 // pred_check_branch
          %471 = sbr.rel (%p469) target = $region44
        $region43: #{tpu_custom_call.1} parent=11 // pred_region
          _
        $region44: #{tpu_custom_call.1} parent=11 // pred_fallthru
          _
        // Predicated region
        $region45: #{tpu_custom_call.1} parent=11 // pred_check
          %p472 = pneg %p278
        $region46: #{tpu_custom_call.1} parent=11 // pred_check_branch
          %474 = sbr.rel (%p472) target = $region48
        $region47: #{tpu_custom_call.1} parent=11 // pred_region
          %s476 = ssub.s32 1024, 1024
          %477 = vsyncadd [#allocation12], %s476
          %s478 = sshll.u32 [#allocation13], 4
          %s479 = int_to_ptr.vmem [resolvable:$true] %s478
          %484 = dma.hbm_to_vmem [thread:$0]  %s10, 1024, %s479, [#allocation12], 64, 64, 4
        $region48: #{tpu_custom_call.1} parent=11 // pred_fallthru
          _
        // Predicated region
        $region49: #{tpu_custom_call.1} parent=11 // pred_check
          %p485 = pneg %p299
        $region50: #{tpu_custom_call.1} parent=11 // pred_check_branch
          %487 = sbr.rel (%p485) target = $region52
        $region51: #{tpu_custom_call.1} parent=11 // pred_region
          _
        $region52: #{tpu_custom_call.1} parent=11 // pred_fallthru
          _
        // Predicated region
        $region53: #{tpu_custom_call.1} parent=11 // pred_check
          %p488 = pneg %p320
        $region54: #{tpu_custom_call.1} parent=11 // pred_check_branch
          %490 = sbr.rel (%p488) target = $region56
        $region55: #{tpu_custom_call.1} parent=11 // pred_region
          %s492 = ssub.s32 1024, 1024
          %493 = vsyncadd [#allocation15], %s492
          %s494 = sshll.u32 [#allocation14], 4
          %s495 = int_to_ptr.vmem [resolvable:$true] %s494
          %500 = dma.hbm_to_vmem [thread:$0]  %s12, 1024, %s495, [#allocation15], 64, 64, 4
        $region56: #{tpu_custom_call.1} parent=11 // pred_fallthru
          _
        // Predicated region
        $region57: #{tpu_custom_call.1} parent=11 // pred_check
          %p501 = pneg %p341
        $region58: #{tpu_custom_call.1} parent=11 // pred_check_branch
          %503 = sbr.rel (%p501) target = $region60
        $region59: #{tpu_custom_call.1} parent=11 // pred_region
          _
        $region60: #{tpu_custom_call.1} parent=11 // pred_fallthru
          _
      $region12: #{tpu_custom_call.1} parent=5 // pred_fallthru
        _
      %p504 = scmp.lt.s32.totalorder %s37, 4
      // Predicated region
      $region61: #{tpu_custom_call.1} parent=5 // pred_check
        %p505 = pneg %p504
      $region62: #{tpu_custom_call.1} parent=5 // pred_check_branch
        %507 = sbr.rel (%p505) target = $region64
      $region63: #{tpu_custom_call.1} parent=5 // pred_region
        // Predicated region
        $region65: #{tpu_custom_call.1} parent=63 // pred_check
          %p508 = pneg %p57
        $region66: #{tpu_custom_call.1} parent=63 // pred_check_branch
          %510 = sbr.rel (%p508) target = $region68
        $region67: #{tpu_custom_call.1} parent=63 // pred_region
          %s511 = sand.u32 %s47, 1
          %s512 = scalar_lea.sflag [#allocation3], %s511
          %s513 = sand.u32 %s47, 1
          %s514 = smul.addr %s513, 128
          %s515 = scalar_lea.vmem [#allocation2], %s514
          %s516 = smul.u32 32, %s37
          %s518 = ssub.s32 2048, 2048
          %519 = vsyncadd %s512, %s518
          %s520 = smul.addr %s516, 64
          %s521 = scalar_lea.hbm %s0, %s520
          %s522 = sshll.u32 %s515, 4
          %s523 = int_to_ptr.vmem [resolvable:$true] %s522
          %528 = dma.hbm_to_vmem [thread:$0]  %s521, 2048, %s523, %s512, 64, 64, 4
        $region68: #{tpu_custom_call.1} parent=63 // pred_fallthru
          _
        // Predicated region
        $region69: #{tpu_custom_call.1} parent=63 // pred_check
          %p529 = pneg %p83
        $region70: #{tpu_custom_call.1} parent=63 // pred_check_branch
          %531 = sbr.rel (%p529) target = $region72
        $region71: #{tpu_custom_call.1} parent=63 // pred_region
          %s532 = sand.u32 %s37, 1
          %s533 = scalar_lea.sflag [#allocation6], %s532
          %s534 = sand.u32 %s73, 1
          %s535 = smul.addr %s534, 128
          %s536 = scalar_lea.vmem [#allocation5], %s535
          %s537 = smul.u32 32, %s37
          %s539 = ssub.s32 2048, 2048
          %540 = vsyncadd %s533, %s539
          %s541 = smul.addr %s537, 64
          %s542 = scalar_lea.hbm %s1, %s541
          %s543 = sshll.u32 %s536, 4
          %s544 = int_to_ptr.vmem [resolvable:$true] %s543
          %549 = dma.hbm_to_vmem [thread:$0]  %s542, 2048, %s544, %s533, 64, 64, 4
        $region72: #{tpu_custom_call.1} parent=63 // pred_fallthru
          _
      $region64: #{tpu_custom_call.1} parent=5 // pred_fallthru
        _
      %p550 = scmp.le.s32.totalorder 1, %s37
      %p551 = scmp.lt.s32.totalorder %s37, 5
      %p552 = pnand %p550, %p551
      %p553 = pneg %p552
      // Predicated region
      $region73: #{tpu_custom_call.1} parent=5 // pred_check
        _
      $region74: #{tpu_custom_call.1} parent=5 // pred_check_branch
        %555 = sbr.rel (%p552) target = $region76
      $region75: #{tpu_custom_call.1} parent=5 // pred_region
        %s556 = ssub.s32 %s37, 1
        %s557 = sand.u32 %s50, 1
        %s558 = scalar_lea.sflag [#allocation3], %s557
        %s559 = sand.u32 %s50, 1
        %s560 = smul.addr %s559, 128
        %s561 = scalar_lea.vmem [#allocation2], %s560
        // Predicated region
        $region77: #{tpu_custom_call.1} parent=75 // pred_check
          %p562 = pneg %p63
        $region78: #{tpu_custom_call.1} parent=75 // pred_check_branch
          %564 = sbr.rel (%p562) target = $region80
        $region79: #{tpu_custom_call.1} parent=75 // pred_region
          %565 = dma.done %s558, 2048
        $region80: #{tpu_custom_call.1} parent=75 // pred_fallthru
          _
        %s566 = sand.u32 %s42, 1
        %s567 = scalar_lea.sflag [#allocation6], %s566
        %s568 = sand.u32 %s76, 1
        %s569 = smul.addr %s568, 128
        %s570 = scalar_lea.vmem [#allocation5], %s569
        // Predicated region
        $region81: #{tpu_custom_call.1} parent=75 // pred_check
          %p571 = pneg %p89
        $region82: #{tpu_custom_call.1} parent=75 // pred_check_branch
          %573 = sbr.rel (%p571) target = $region84
        $region83: #{tpu_custom_call.1} parent=75 // pred_region
          %574 = dma.done %s567, 2048
        $region84: #{tpu_custom_call.1} parent=75 // pred_fallthru
          _
        // Predicated region
        $region85: #{tpu_custom_call.1} parent=75 // pred_check
          %p575 = pneg %p110
        $region86: #{tpu_custom_call.1} parent=75 // pred_check_branch
          %577 = sbr.rel (%p575) target = $region88
        $region87: #{tpu_custom_call.1} parent=75 // pred_region
          %578 = dma.done [#allocation6], 1024
        $region88: #{tpu_custom_call.1} parent=75 // pred_fallthru
          _
        // Predicated region
        $region89: #{tpu_custom_call.1} parent=75 // pred_check
          %p579 = pneg %p152
        $region90: #{tpu_custom_call.1} parent=75 // pred_check_branch
          %581 = sbr.rel (%p579) target = $region92
        $region91: #{tpu_custom_call.1} parent=75 // pred_region
          %582 = dma.done [#allocation9], 1024
        $region92: #{tpu_custom_call.1} parent=75 // pred_fallthru
          _
        // Predicated region
        $region93: #{tpu_custom_call.1} parent=75 // pred_check
          %p583 = pneg %p194
        $region94: #{tpu_custom_call.1} parent=75 // pred_check_branch
          %585 = sbr.rel (%p583) target = $region96
        $region95: #{tpu_custom_call.1} parent=75 // pred_region
          %586 = dma.done [#allocation9], 1024
        $region96: #{tpu_custom_call.1} parent=75 // pred_fallthru
          _
        // Predicated region
        $region97: #{tpu_custom_call.1} parent=75 // pred_check
          %p587 = pneg %p236
        $region98: #{tpu_custom_call.1} parent=75 // pred_check_branch
          %589 = sbr.rel (%p587) target = $region100
        $region99: #{tpu_custom_call.1} parent=75 // pred_region
          %590 = dma.done [#allocation12], 1024
        $region100: #{tpu_custom_call.1} parent=75 // pred_fallthru
          _
        // Predicated region
        $region101: #{tpu_custom_call.1} parent=75 // pred_check
          %p591 = pneg %p278
        $region102: #{tpu_custom_call.1} parent=75 // pred_check_branch
          %593 = sbr.rel (%p591) target = $region104
        $region103: #{tpu_custom_call.1} parent=75 // pred_region
          %594 = dma.done [#allocation12], 1024
        $region104: #{tpu_custom_call.1} parent=75 // pred_fallthru
          _
        // Predicated region
        $region105: #{tpu_custom_call.1} parent=75 // pred_check
          %p595 = pneg %p320
        $region106: #{tpu_custom_call.1} parent=75 // pred_check_branch
          %597 = sbr.rel (%p595) target = $region108
        $region107: #{tpu_custom_call.1} parent=75 // pred_region
          %598 = dma.done [#allocation15], 1024
        $region108: #{tpu_custom_call.1} parent=75 // pred_fallthru
          _
        %s599 = sand.u32 %s50, 1
        %s600 = scalar_lea.sflag [#allocation3], %s599
        %s601 = sand.u32 %s50, 1
        %s602 = smul.addr %s601, 128
        %s603 = scalar_lea.vmem [#allocation2], %s602
        %p604 = pneg %p63
        %p605 = pneg %p60
        %s606 = sand.u32 %s42, 1
        %s607 = scalar_lea.sflag [#allocation6], %s606
        %s608 = sand.u32 %s76, 1
        %s609 = smul.addr %s608, 128
        %s610 = scalar_lea.vmem [#allocation5], %s609
        %p611 = pneg %p89
        %p612 = pneg %p86
        %p613 = pneg %p110
        %p614 = pneg %p107
        %p615 = pneg %p131
        %p616 = pneg %p128
        %p617 = pneg %p152
        %p618 = pneg %p149
        %p619 = pneg %p173
        %p620 = pneg %p170
        %p621 = pneg %p194
        %p622 = pneg %p191
        %p623 = pneg %p215
        %p624 = pneg %p212
        %p625 = pneg %p236
        %p626 = pneg %p233
        %p627 = pneg %p257
        %p628 = pneg %p254
        %p629 = pneg %p278
        %p630 = pneg %p275
        %p631 = pneg %p299
        %p632 = pneg %p296
        %p633 = pneg %p320
        %p634 = pneg %p317
        %p635 = pneg %p341
        %p636 = pneg %p338
        %p637 = pneg %p367
        %p638 = pneg %p364
        %s639 = sand.u32 %s354, 1
        %s640 = scalar_lea.sflag [#allocation4], %s639
        %s641 = sand.u32 %s354, 1
        %s642 = smul.addr %s641, 128
        %s643 = scalar_lea.vmem [#allocation16], %s642
        %p644 = pneg %p393
        %p645 = pneg %p390
        %s646 = sand.u32 %s380, 1
        %s647 = scalar_lea.sflag [#allocation18], %s646
        %s648 = sand.u32 %s380, 1
        %s649 = smul.addr %s648, 128
        %s650 = scalar_lea.vmem [#allocation17], %s649
        %s651 = smul.u32 32, %s42
        %s652 = smul.u32 32, %s42
        %s653 = smul.u32 32, %s42
        %s654 = smul.u32 32, %s42
        %v656 = vld [vmem:[%s561] sm:$0xf]
        %v657 = vld [vmem:[%s561 + $0x4] sm:$0xf]
        %v658 = vld [vmem:[%s561 + $0x8] sm:$0xf]
        %v659 = vld [vmem:[%s561 + $0xc] sm:$0xf]
        %v660 = vld [vmem:[%s561 + $0x10] sm:$0xf]
        %v661 = vld [vmem:[%s561 + $0x14] sm:$0xf]
        %v662 = vld [vmem:[%s561 + $0x18] sm:$0xf]
        %v663 = vld [vmem:[%s561 + $0x1c] sm:$0xf]
        %v664 = vld [vmem:[%s561 + $0x20] sm:$0xf]
        %v665 = vld [vmem:[%s561 + $0x24] sm:$0xf]
        %v666 = vld [vmem:[%s561 + $0x28] sm:$0xf]
        %v667 = vld [vmem:[%s561 + $0x2c] sm:$0xf]
        %v668 = vld [vmem:[%s561 + $0x30] sm:$0xf]
        %v669 = vld [vmem:[%s561 + $0x34] sm:$0xf]
        %v670 = vld [vmem:[%s561 + $0x38] sm:$0xf]
        %v671 = vld [vmem:[%s561 + $0x3c] sm:$0xf]
        %v672 = vld [vmem:[%s561 + $0x40] sm:$0xf]
        %v673 = vld [vmem:[%s561 + $0x44] sm:$0xf]
        %v674 = vld [vmem:[%s561 + $0x48] sm:$0xf]
        %v675 = vld [vmem:[%s561 + $0x4c] sm:$0xf]
        %v676 = vld [vmem:[%s561 + $0x50] sm:$0xf]
        %v677 = vld [vmem:[%s561 + $0x54] sm:$0xf]
        %v678 = vld [vmem:[%s561 + $0x58] sm:$0xf]
        %v679 = vld [vmem:[%s561 + $0x5c] sm:$0xf]
        %v680 = vld [vmem:[%s561 + $0x60] sm:$0xf]
        %v681 = vld [vmem:[%s561 + $0x64] sm:$0xf]
        %v682 = vld [vmem:[%s561 + $0x68] sm:$0xf]
        %v683 = vld [vmem:[%s561 + $0x6c] sm:$0xf]
        %v684 = vld [vmem:[%s561 + $0x70] sm:$0xf]
        %v685 = vld [vmem:[%s561 + $0x74] sm:$0xf]
        %v686 = vld [vmem:[%s561 + $0x78] sm:$0xf]
        %v687 = vld [vmem:[%s561 + $0x7c] sm:$0xf]
        %v688 = vld [vmem:[#allocation7] sm:$0xf]
        %v689 = vld [vmem:[#allocation7 + $0x4] sm:$0xf]
        %v690 = vld [vmem:[#allocation7 + $0x8] sm:$0xf]
        %v691 = vld [vmem:[#allocation7 + $0xc] sm:$0xf]
        %v692 = vld [vmem:[#allocation7 + $0x10] sm:$0xf]
        %v693 = vld [vmem:[#allocation7 + $0x14] sm:$0xf]
        %v694 = vld [vmem:[#allocation7 + $0x18] sm:$0xf]
        %v695 = vld [vmem:[#allocation7 + $0x1c] sm:$0xf]
        %v696 = vld [vmem:[#allocation7 + $0x20] sm:$0xf]
        %v697 = vld [vmem:[#allocation7 + $0x24] sm:$0xf]
        %v698 = vld [vmem:[#allocation7 + $0x28] sm:$0xf]
        %v699 = vld [vmem:[#allocation7 + $0x2c] sm:$0xf]
        %v700 = vld [vmem:[#allocation7 + $0x30] sm:$0xf]
        %v701 = vld [vmem:[#allocation7 + $0x34] sm:$0xf]
        %v702 = vld [vmem:[#allocation7 + $0x38] sm:$0xf]
        %v703 = vld [vmem:[#allocation7 + $0x3c] sm:$0xf]
        %v704 = vld [vmem:[%s3] sm:$0x1]
        %v706 = vlaneseq
        %v707 = vshrl.u32 %v706, 7
        %v708 = vsub.s32 0, %v707
        %v709 = vrot.slane %v704, %v708
        %v743 = vunpack.c.l.b16 %v656
        %v744 = vunpack.c.l.b16 %v657
        %v745 = vunpack.c.l.b16 %v658
        %v746 = vunpack.c.l.b16 %v659
        %v747 = vunpack.c.l.b16 %v660
        %v748 = vunpack.c.l.b16 %v661
        %v749 = vunpack.c.l.b16 %v662
        %v750 = vunpack.c.l.b16 %v663
        %v751 = vunpack.c.l.b16 %v664
        %v752 = vunpack.c.l.b16 %v665
        %v753 = vunpack.c.l.b16 %v666
        %v754 = vunpack.c.l.b16 %v667
        %v755 = vunpack.c.l.b16 %v668
        %v756 = vunpack.c.l.b16 %v669
        %v757 = vunpack.c.l.b16 %v670
        %v758 = vunpack.c.l.b16 %v671
        %v759 = vunpack.c.l.b16 %v672
        %v760 = vunpack.c.l.b16 %v673
        %v761 = vunpack.c.l.b16 %v674
        %v762 = vunpack.c.l.b16 %v675
        %v763 = vunpack.c.l.b16 %v676
        %v764 = vunpack.c.l.b16 %v677
        %v765 = vunpack.c.l.b16 %v678
        %v766 = vunpack.c.l.b16 %v679
        %v767 = vunpack.c.l.b16 %v680
        %v768 = vunpack.c.l.b16 %v681
        %v769 = vunpack.c.l.b16 %v682
        %v770 = vunpack.c.l.b16 %v683
        %v771 = vunpack.c.l.b16 %v684
        %v772 = vunpack.c.l.b16 %v685
        %v773 = vunpack.c.l.b16 %v686
        %v774 = vunpack.c.l.b16 %v687
        %v775 = vpack.c.b16 %v744, %v743
        %v776 = vpack.c.b16 %v746, %v745
        %v777 = vpack.c.b16 %v748, %v747
        %v778 = vpack.c.b16 %v750, %v749
        %v779 = vpack.c.b16 %v752, %v751
        %v780 = vpack.c.b16 %v754, %v753
        %v781 = vpack.c.b16 %v756, %v755
        %v782 = vpack.c.b16 %v758, %v757
        %v783 = vpack.c.b16 %v760, %v759
        %v784 = vpack.c.b16 %v762, %v761
        %v785 = vpack.c.b16 %v764, %v763
        %v786 = vpack.c.b16 %v766, %v765
        %v787 = vpack.c.b16 %v768, %v767
        %v788 = vpack.c.b16 %v770, %v769
        %v789 = vpack.c.b16 %v772, %v771
        %v790 = vpack.c.b16 %v774, %v773
        %v823 = vunpack.c.l.b16 %v688
        %v824 = vunpack.c.l.b16 %v689
        %v825 = vunpack.c.l.b16 %v690
        %v826 = vunpack.c.l.b16 %v691
        %v827 = vunpack.c.l.b16 %v692
        %v828 = vunpack.c.l.b16 %v693
        %v829 = vunpack.c.l.b16 %v694
        %v830 = vunpack.c.l.b16 %v695
        %v831 = vunpack.c.l.b16 %v696
        %v832 = vunpack.c.l.b16 %v697
        %v833 = vunpack.c.l.b16 %v698
        %v834 = vunpack.c.l.b16 %v699
        %v835 = vunpack.c.l.b16 %v700
        %v836 = vunpack.c.l.b16 %v701
        %v837 = vunpack.c.l.b16 %v702
        %v838 = vunpack.c.l.b16 %v703
        %v839 = vpack.c.b16 %v824, %v823
        %v840 = vpack.c.b16 %v826, %v825
        %v841 = vpack.c.b16 %v828, %v827
        %v842 = vpack.c.b16 %v830, %v829
        %v843 = vpack.c.b16 %v832, %v831
        %v844 = vpack.c.b16 %v834, %v833
        %v845 = vpack.c.b16 %v836, %v835
        %v846 = vpack.c.b16 %v838, %v837
        %855 = vmatprep.subr.bf16.mxu0 0
        %856 = vmatpush1.bf16.msra.mxu0 %v839
        %857 = vmatprep.subr.bf16.mxu0 0
        %858 = vmatpush1.bf16.msra.mxu0 %v840
        %859 = vmatprep.subr.bf16.mxu0 0
        %860 = vmatpush1.bf16.msra.mxu0 %v841
        %861 = vmatprep.subr.bf16.mxu0 0
        %862 = vmatpush1.bf16.msra.mxu0 %v842
        %863 = vmatprep.subr.bf16.mxu0 0
        %864 = vmatpush1.bf16.msra.mxu0 %v843
        %865 = vmatprep.subr.bf16.mxu0 0
        %866 = vmatpush1.bf16.msra.mxu0 %v844
        %867 = vmatprep.subr.bf16.mxu0 0
        %868 = vmatpush1.bf16.msra.mxu0 %v845
        %869 = vmatprep.subr.bf16.mxu0 0
        %870 = vmatpush1.bf16.msra.mxu0 %v846
        %871 = vmatprep.subr.bf16.mxu0 0
        %872 = vmatpush1.bf16.msra.mxu0 0
        %873 = vmatprep.subr.bf16.mxu0 0
        %874 = vmatpush1.bf16.msra.mxu0 0
        %875 = vmatprep.subr.bf16.mxu0 0
        %876 = vmatpush1.bf16.msra.mxu0 0
        %877 = vmatprep.subr.bf16.mxu0 0
        %878 = vmatpush1.bf16.msra.mxu0 0
        %879 = vmatprep.subr.bf16.mxu0 0
        %880 = vmatpush1.bf16.msra.mxu0 0
        %881 = vmatprep.subr.bf16.mxu0 0
        %882 = vmatpush1.bf16.msra.mxu0 0
        %883 = vmatprep.subr.bf16.mxu0 0
        %884 = vmatpush1.bf16.msra.mxu0 0
        %885 = vmatprep.subr.bf16.mxu0 0
        %886 = vmatpush1.bf16.msra.mxu0 0
        %887 = vmatprep.mubr.bf16.mxu0 0
        %888 = vmatmul.mubr.bf16.gmra.mrb[0].mxu0 %v775
        %v889 = vpop.f32.mrb[0].mxu0
        %v890 = vadd.f32 %v709, %v889
        %v891 = vpop.f32.mrb[0].mxu0
        %v892 = vpop.f32.mrb[0].mxu0
        %v893 = vadd.f32 %v709, %v892
        %v894 = vpop.f32.mrb[0].mxu0
        %895 = vmatprep.mubr.bf16.mxu0 0
        %896 = vmatmul.mubr.bf16.gmra.mrb[0].mxu0 %v776
        %v897 = vpop.f32.mrb[0].mxu0
        %v898 = vadd.f32 %v709, %v897
        %v899 = vpop.f32.mrb[0].mxu0
        %v900 = vpop.f32.mrb[0].mxu0
        %v901 = vadd.f32 %v709, %v900
        %v902 = vpop.f32.mrb[0].mxu0
        %903 = vmatprep.mubr.bf16.mxu0 0
        %904 = vmatmul.mubr.bf16.gmra.mrb[0].mxu0 %v777
        %v905 = vpop.f32.mrb[0].mxu0
        %v906 = vadd.f32 %v709, %v905
        %v907 = vpop.f32.mrb[0].mxu0
        %v908 = vpop.f32.mrb[0].mxu0
        %v909 = vadd.f32 %v709, %v908
        %v910 = vpop.f32.mrb[0].mxu0
        %911 = vmatprep.mubr.bf16.mxu0 0
        %912 = vmatmul.mubr.bf16.gmra.mrb[0].mxu0 %v778
        %v913 = vpop.f32.mrb[0].mxu0
        %v914 = vadd.f32 %v709, %v913
        %v915 = vpop.f32.mrb[0].mxu0
        %v916 = vpop.f32.mrb[0].mxu0
        %v917 = vadd.f32 %v709, %v916
        %v918 = vpop.f32.mrb[0].mxu0
        %919 = vmatprep.mubr.bf16.mxu0 0
        %920 = vmatmul.mubr.bf16.gmra.mrb[0].mxu0 %v779
        %v921 = vpop.f32.mrb[0].mxu0
        %v922 = vadd.f32 %v709, %v921
        %v923 = vpop.f32.mrb[0].mxu0
        %v924 = vpop.f32.mrb[0].mxu0
        %v925 = vadd.f32 %v709, %v924
        %v926 = vpop.f32.mrb[0].mxu0
        %927 = vmatprep.mubr.bf16.mxu0 0
        %928 = vmatmul.mubr.bf16.gmra.mrb[0].mxu0 %v780
        %v929 = vpop.f32.mrb[0].mxu0
        %v930 = vadd.f32 %v709, %v929
        %v931 = vpop.f32.mrb[0].mxu0
        %v932 = vpop.f32.mrb[0].mxu0
        %v933 = vadd.f32 %v709, %v932
        %v934 = vpop.f32.mrb[0].mxu0
        %935 = vmatprep.mubr.bf16.mxu0 0
        %936 = vmatmul.mubr.bf16.gmra.mrb[0].mxu0 %v781
        %v937 = vpop.f32.mrb[0].mxu0
        %v938 = vadd.f32 %v709, %v937
        %v939 = vpop.f32.mrb[0].mxu0
        %v940 = vpop.f32.mrb[0].mxu0
        %v941 = vadd.f32 %v709, %v940
        %v942 = vpop.f32.mrb[0].mxu0
        %943 = vmatprep.mubr.bf16.mxu0 0
        %944 = vmatmul.mubr.bf16.gmra.mrb[0].mxu0 %v782
        %v945 = vpop.f32.mrb[0].mxu0
        %v946 = vadd.f32 %v709, %v945
        %v947 = vpop.f32.mrb[0].mxu0
        %v948 = vpop.f32.mrb[0].mxu0
        %v949 = vadd.f32 %v709, %v948
        %v950 = vpop.f32.mrb[0].mxu0
        %951 = vmatprep.mubr.bf16.mxu0 0
        %952 = vmatmul.mubr.bf16.gmra.mrb[0].mxu0 %v783
        %v953 = vpop.f32.mrb[0].mxu0
        %v954 = vadd.f32 %v709, %v953
        %v955 = vpop.f32.mrb[0].mxu0
        %v956 = vpop.f32.mrb[0].mxu0
        %v957 = vadd.f32 %v709, %v956
        %v958 = vpop.f32.mrb[0].mxu0
        %959 = vmatprep.mubr.bf16.mxu0 0
        %960 = vmatmul.mubr.bf16.gmra.mrb[0].mxu0 %v784
        %v961 = vpop.f32.mrb[0].mxu0
        %v962 = vadd.f32 %v709, %v961
        %v963 = vpop.f32.mrb[0].mxu0
        %v964 = vpop.f32.mrb[0].mxu0
        %v965 = vadd.f32 %v709, %v964
        %v966 = vpop.f32.mrb[0].mxu0
        %967 = vmatprep.mubr.bf16.mxu0 0
        %968 = vmatmul.mubr.bf16.gmra.mrb[0].mxu0 %v785
        %v969 = vpop.f32.mrb[0].mxu0
        %v970 = vadd.f32 %v709, %v969
        %v971 = vpop.f32.mrb[0].mxu0
        %v972 = vpop.f32.mrb[0].mxu0
        %v973 = vadd.f32 %v709, %v972
        %v974 = vpop.f32.mrb[0].mxu0
        %975 = vmatprep.mubr.bf16.mxu0 0
        %976 = vmatmul.mubr.bf16.gmra.mrb[0].mxu0 %v786
        %v977 = vpop.f32.mrb[0].mxu0
        %v978 = vadd.f32 %v709, %v977
        %v979 = vpop.f32.mrb[0].mxu0
        %v980 = vpop.f32.mrb[0].mxu0
        %v981 = vadd.f32 %v709, %v980
        %v982 = vpop.f32.mrb[0].mxu0
        %983 = vmatprep.mubr.bf16.mxu0 0
        %984 = vmatmul.mubr.bf16.gmra.mrb[0].mxu0 %v787
        %v985 = vpop.f32.mrb[0].mxu0
        %v986 = vadd.f32 %v709, %v985
        %v987 = vpop.f32.mrb[0].mxu0
        %v988 = vpop.f32.mrb[0].mxu0
        %v989 = vadd.f32 %v709, %v988
        %v990 = vpop.f32.mrb[0].mxu0
        %991 = vmatprep.mubr.bf16.mxu0 0
        %992 = vmatmul.mubr.bf16.gmra.mrb[0].mxu0 %v788
        %v993 = vpop.f32.mrb[0].mxu0
        %v994 = vadd.f32 %v709, %v993
        %v995 = vpop.f32.mrb[0].mxu0
        %v996 = vpop.f32.mrb[0].mxu0
        %v997 = vadd.f32 %v709, %v996
        %v998 = vpop.f32.mrb[0].mxu0
        %999 = vmatprep.mubr.bf16.mxu0 0
        %1000 = vmatmul.mubr.bf16.gmra.mrb[0].mxu0 %v789
        %v1001 = vpop.f32.mrb[0].mxu0
        %v1002 = vadd.f32 %v709, %v1001
        %v1003 = vpop.f32.mrb[0].mxu0
        %v1004 = vpop.f32.mrb[0].mxu0
        %v1005 = vadd.f32 %v709, %v1004
        %v1006 = vpop.f32.mrb[0].mxu0
        %1007 = vmatprep.mubr.bf16.mxu0 0
        %1008 = vmatmul.mubr.bf16.gmra.mrb[0].mxu0 %v790
        %v1009 = vpop.f32.mrb[0].mxu0
        %v1010 = vadd.f32 %v709, %v1009
        %v1011 = vpop.f32.mrb[0].mxu0
        %v1012 = vpop.f32.mrb[0].mxu0
        %v1013 = vadd.f32 %v709, %v1012
        %v1014 = vpop.f32.mrb[0].mxu0
        %1015 = vdwg.mxu0
        %v1016 = vmax.f32 %v890, 0.0
        %v1017 = vmax.f32 %v893, 0.0
        %v1018 = vmax.f32 %v898, 0.0
        %v1019 = vmax.f32 %v901, 0.0
        %v1020 = vmax.f32 %v906, 0.0
        %v1021 = vmax.f32 %v909, 0.0
        %v1022 = vmax.f32 %v914, 0.0
        %v1023 = vmax.f32 %v917, 0.0
        %v1024 = vmax.f32 %v922, 0.0
        %v1025 = vmax.f32 %v925, 0.0
        %v1026 = vmax.f32 %v930, 0.0
        %v1027 = vmax.f32 %v933, 0.0
        %v1028 = vmax.f32 %v938, 0.0
        %v1029 = vmax.f32 %v941, 0.0
        %v1030 = vmax.f32 %v946, 0.0
        %v1031 = vmax.f32 %v949, 0.0
        %v1032 = vmax.f32 %v954, 0.0
        %v1033 = vmax.f32 %v957, 0.0
        %v1034 = vmax.f32 %v962, 0.0
        %v1035 = vmax.f32 %v965, 0.0
        %v1036 = vmax.f32 %v970, 0.0
        %v1037 = vmax.f32 %v973, 0.0
        %v1038 = vmax.f32 %v978, 0.0
        %v1039 = vmax.f32 %v981, 0.0
        %v1040 = vmax.f32 %v986, 0.0
        %v1041 = vmax.f32 %v989, 0.0
        %v1042 = vmax.f32 %v994, 0.0
        %v1043 = vmax.f32 %v997, 0.0
        %v1044 = vmax.f32 %v1002, 0.0
        %v1045 = vmax.f32 %v1005, 0.0
        %v1046 = vmax.f32 %v1010, 0.0
        %v1047 = vmax.f32 %v1013, 0.0
        %v1048 = vpack.c.bf16 %v1017, %v1016
        %v1049 = vpack.c.bf16 %v1019, %v1018
        %v1050 = vpack.c.bf16 %v1021, %v1020
        %v1051 = vpack.c.bf16 %v1023, %v1022
        %v1052 = vpack.c.bf16 %v1025, %v1024
        %v1053 = vpack.c.bf16 %v1027, %v1026
        %v1054 = vpack.c.bf16 %v1029, %v1028
        %v1055 = vpack.c.bf16 %v1031, %v1030
        %v1056 = vpack.c.bf16 %v1033, %v1032
        %v1057 = vpack.c.bf16 %v1035, %v1034
        %v1058 = vpack.c.bf16 %v1037, %v1036
        %v1059 = vpack.c.bf16 %v1039, %v1038
        %v1060 = vpack.c.bf16 %v1041, %v1040
        %v1061 = vpack.c.bf16 %v1043, %v1042
        %v1062 = vpack.c.bf16 %v1045, %v1044
        %v1063 = vpack.c.bf16 %v1047, %v1046
        %v1064 = vld [vmem:[#allocation8] sm:$0xf]
        %v1065 = vld [vmem:[#allocation8 + $0x4] sm:$0xf]
        %v1066 = vld [vmem:[#allocation8 + $0x8] sm:$0xf]
        %v1067 = vld [vmem:[#allocation8 + $0xc] sm:$0xf]
        %v1068 = vld [vmem:[#allocation8 + $0x10] sm:$0xf]
        %v1069 = vld [vmem:[#allocation8 + $0x14] sm:$0xf]
        %v1070 = vld [vmem:[#allocation8 + $0x18] sm:$0xf]
        %v1071 = vld [vmem:[#allocation8 + $0x1c] sm:$0xf]
        %v1072 = vld [vmem:[#allocation8 + $0x20] sm:$0xf]
        %v1073 = vld [vmem:[#allocation8 + $0x24] sm:$0xf]
        %v1074 = vld [vmem:[#allocation8 + $0x28] sm:$0xf]
        %v1075 = vld [vmem:[#allocation8 + $0x2c] sm:$0xf]
        %v1076 = vld [vmem:[#allocation8 + $0x30] sm:$0xf]
        %v1077 = vld [vmem:[#allocation8 + $0x34] sm:$0xf]
        %v1078 = vld [vmem:[#allocation8 + $0x38] sm:$0xf]
        %v1079 = vld [vmem:[#allocation8 + $0x3c] sm:$0xf]
        %v1080 = vld [vmem:[%s5] sm:$0x1]
        %v1082 = vlaneseq
        %v1083 = vshrl.u32 %v1082, 7
        %v1084 = vsub.s32 0, %v1083
        %v1085 = vrot.slane %v1080, %v1084
        %v1103 = vunpack.c.l.b16 %v1064
        %v1104 = vunpack.c.l.b16 %v1065
        %v1105 = vunpack.c.l.b16 %v1066
        %v1106 = vunpack.c.l.b16 %v1067
        %v1107 = vunpack.c.l.b16 %v1068
        %v1108 = vunpack.c.l.b16 %v1069
        %v1109 = vunpack.c.l.b16 %v1070
        %v1110 = vunpack.c.l.b16 %v1071
        %v1111 = vunpack.c.l.b16 %v1072
        %v1112 = vunpack.c.l.b16 %v1073
        %v1113 = vunpack.c.l.b16 %v1074
        %v1114 = vunpack.c.l.b16 %v1075
        %v1115 = vunpack.c.l.b16 %v1076
        %v1116 = vunpack.c.l.b16 %v1077
        %v1117 = vunpack.c.l.b16 %v1078
        %v1118 = vunpack.c.l.b16 %v1079
        %v1119 = vpack.c.b16 %v1104, %v1103
        %v1120 = vpack.c.b16 %v1106, %v1105
        %v1121 = vpack.c.b16 %v1108, %v1107
        %v1122 = vpack.c.b16 %v1110, %v1109
        %v1123 = vpack.c.b16 %v1112, %v1111
        %v1124 = vpack.c.b16 %v1114, %v1113
        %v1125 = vpack.c.b16 %v1116, %v1115
        %v1126 = vpack.c.b16 %v1118, %v1117
        %1135 = vmatprep.subr.bf16.mxu0 0
        %1136 = vmatpush1.bf16.msra.mxu0 %v1119
        %1137 = vmatprep.subr.bf16.mxu0 0
        %1138 = vmatpush1.bf16.msra.mxu0 %v1120
        %1139 = vmatprep.subr.bf16.mxu0 0
        %1140 = vmatpush1.bf16.msra.mxu0 %v1121
        %1141 = vmatprep.subr.bf16.mxu0 0
        %1142 = vmatpush1.bf16.msra.mxu0 %v1122
        %1143 = vmatprep.subr.bf16.mxu0 0
        %1144 = vmatpush1.bf16.msra.mxu0 %v1123
        %1145 = vmatprep.subr.bf16.mxu0 0
        %1146 = vmatpush1.bf16.msra.mxu0 %v1124
        %1147 = vmatprep.subr.bf16.mxu0 0
        %1148 = vmatpush1.bf16.msra.mxu0 %v1125
        %1149 = vmatprep.subr.bf16.mxu0 0
        %1150 = vmatpush1.bf16.msra.mxu0 %v1126
        %1151 = vmatprep.subr.bf16.mxu0 0
        %1152 = vmatpush1.bf16.msra.mxu0 0
        %1153 = vmatprep.subr.bf16.mxu0 0
        %1154 = vmatpush1.bf16.msra.mxu0 0
        %1155 = vmatprep.subr.bf16.mxu0 0
        %1156 = vmatpush1.bf16.msra.mxu0 0
        %1157 = vmatprep.subr.bf16.mxu0 0
        %1158 = vmatpush1.bf16.msra.mxu0 0
        %1159 = vmatprep.subr.bf16.mxu0 0
        %1160 = vmatpush1.bf16.msra.mxu0 0
        %1161 = vmatprep.subr.bf16.mxu0 0
        %1162 = vmatpush1.bf16.msra.mxu0 0
        %1163 = vmatprep.subr.bf16.mxu0 0
        %1164 = vmatpush1.bf16.msra.mxu0 0
        %1165 = vmatprep.subr.bf16.mxu0 0
        %1166 = vmatpush1.bf16.msra.mxu0 0
        %1167 = vmatprep.mubr.bf16.mxu0 0
        %1168 = vmatmul.mubr.bf16.gmra.mrb[0].mxu0 %v1048
        %v1169 = vpop.f32.mrb[0].mxu0
        %v1170 = vadd.f32 %v1085, %v1169
        %v1171 = vpop.f32.mrb[0].mxu0
        %v1172 = vpop.f32.mrb[0].mxu0
        %v1173 = vadd.f32 %v1085, %v1172
        %v1174 = vpop.f32.mrb[0].mxu0
        %1175 = vmatprep.mubr.bf16.mxu0 0
        %1176 = vmatmul.mubr.bf16.gmra.mrb[0].mxu0 %v1049
        %v1177 = vpop.f32.mrb[0].mxu0
        %v1178 = vadd.f32 %v1085, %v1177
        %v1179 = vpop.f32.mrb[0].mxu0
        %v1180 = vpop.f32.mrb[0].mxu0
        %v1181 = vadd.f32 %v1085, %v1180
        %v1182 = vpop.f32.mrb[0].mxu0
        %1183 = vmatprep.mubr.bf16.mxu0 0
        %1184 = vmatmul.mubr.bf16.gmra.mrb[0].mxu0 %v1050
        %v1185 = vpop.f32.mrb[0].mxu0
        %v1186 = vadd.f32 %v1085, %v1185
        %v1187 = vpop.f32.mrb[0].mxu0
        %v1188 = vpop.f32.mrb[0].mxu0
        %v1189 = vadd.f32 %v1085, %v1188
        %v1190 = vpop.f32.mrb[0].mxu0
        %1191 = vmatprep.mubr.bf16.mxu0 0
        %1192 = vmatmul.mubr.bf16.gmra.mrb[0].mxu0 %v1051
        %v1193 = vpop.f32.mrb[0].mxu0
        %v1194 = vadd.f32 %v1085, %v1193
        %v1195 = vpop.f32.mrb[0].mxu0
        %v1196 = vpop.f32.mrb[0].mxu0
        %v1197 = vadd.f32 %v1085, %v1196
        %v1198 = vpop.f32.mrb[0].mxu0
        %1199 = vmatprep.mubr.bf16.mxu0 0
        %1200 = vmatmul.mubr.bf16.gmra.mrb[0].mxu0 %v1052
        %v1201 = vpop.f32.mrb[0].mxu0
        %v1202 = vadd.f32 %v1085, %v1201
        %v1203 = vpop.f32.mrb[0].mxu0
        %v1204 = vpop.f32.mrb[0].mxu0
        %v1205 = vadd.f32 %v1085, %v1204
        %v1206 = vpop.f32.mrb[0].mxu0
        %1207 = vmatprep.mubr.bf16.mxu0 0
        %1208 = vmatmul.mubr.bf16.gmra.mrb[0].mxu0 %v1053
        %v1209 = vpop.f32.mrb[0].mxu0
        %v1210 = vadd.f32 %v1085, %v1209
        %v1211 = vpop.f32.mrb[0].mxu0
        %v1212 = vpop.f32.mrb[0].mxu0
        %v1213 = vadd.f32 %v1085, %v1212
        %v1214 = vpop.f32.mrb[0].mxu0
        %1215 = vmatprep.mubr.bf16.mxu0 0
        %1216 = vmatmul.mubr.bf16.gmra.mrb[0].mxu0 %v1054
        %v1217 = vpop.f32.mrb[0].mxu0
        %v1218 = vadd.f32 %v1085, %v1217
        %v1219 = vpop.f32.mrb[0].mxu0
        %v1220 = vpop.f32.mrb[0].mxu0
        %v1221 = vadd.f32 %v1085, %v1220
        %v1222 = vpop.f32.mrb[0].mxu0
        %1223 = vmatprep.mubr.bf16.mxu0 0
        %1224 = vmatmul.mubr.bf16.gmra.mrb[0].mxu0 %v1055
        %v1225 = vpop.f32.mrb[0].mxu0
        %v1226 = vadd.f32 %v1085, %v1225
        %v1227 = vpop.f32.mrb[0].mxu0
        %v1228 = vpop.f32.mrb[0].mxu0
        %v1229 = vadd.f32 %v1085, %v1228
        %v1230 = vpop.f32.mrb[0].mxu0
        %1231 = vmatprep.mubr.bf16.mxu0 0
        %1232 = vmatmul.mubr.bf16.gmra.mrb[0].mxu0 %v1056
        %v1233 = vpop.f32.mrb[0].mxu0
        %v1234 = vadd.f32 %v1085, %v1233
        %v1235 = vpop.f32.mrb[0].mxu0
        %v1236 = vpop.f32.mrb[0].mxu0
        %v1237 = vadd.f32 %v1085, %v1236
        %v1238 = vpop.f32.mrb[0].mxu0
        %1239 = vmatprep.mubr.bf16.mxu0 0
        %1240 = vmatmul.mubr.bf16.gmra.mrb[0].mxu0 %v1057
        %v1241 = vpop.f32.mrb[0].mxu0
        %v1242 = vadd.f32 %v1085, %v1241
        %v1243 = vpop.f32.mrb[0].mxu0
        %v1244 = vpop.f32.mrb[0].mxu0
        %v1245 = vadd.f32 %v1085, %v1244
        %v1246 = vpop.f32.mrb[0].mxu0
        %1247 = vmatprep.mubr.bf16.mxu0 0
        %1248 = vmatmul.mubr.bf16.gmra.mrb[0].mxu0 %v1058
        %v1249 = vpop.f32.mrb[0].mxu0
        %v1250 = vadd.f32 %v1085, %v1249
        %v1251 = vpop.f32.mrb[0].mxu0
        %v1252 = vpop.f32.mrb[0].mxu0
        %v1253 = vadd.f32 %v1085, %v1252
        %v1254 = vpop.f32.mrb[0].mxu0
        %1255 = vmatprep.mubr.bf16.mxu0 0
        %1256 = vmatmul.mubr.bf16.gmra.mrb[0].mxu0 %v1059
        %v1257 = vpop.f32.mrb[0].mxu0
        %v1258 = vadd.f32 %v1085, %v1257
        %v1259 = vpop.f32.mrb[0].mxu0
        %v1260 = vpop.f32.mrb[0].mxu0
        %v1261 = vadd.f32 %v1085, %v1260
        %v1262 = vpop.f32.mrb[0].mxu0
        %1263 = vmatprep.mubr.bf16.mxu0 0
        %1264 = vmatmul.mubr.bf16.gmra.mrb[0].mxu0 %v1060
        %v1265 = vpop.f32.mrb[0].mxu0
        %v1266 = vadd.f32 %v1085, %v1265
        %v1267 = vpop.f32.mrb[0].mxu0
        %v1268 = vpop.f32.mrb[0].mxu0
        %v1269 = vadd.f32 %v1085, %v1268
        %v1270 = vpop.f32.mrb[0].mxu0
        %1271 = vmatprep.mubr.bf16.mxu0 0
        %1272 = vmatmul.mubr.bf16.gmra.mrb[0].mxu0 %v1061
        %v1273 = vpop.f32.mrb[0].mxu0
        %v1274 = vadd.f32 %v1085, %v1273
        %v1275 = vpop.f32.mrb[0].mxu0
        %v1276 = vpop.f32.mrb[0].mxu0
        %v1277 = vadd.f32 %v1085, %v1276
        %v1278 = vpop.f32.mrb[0].mxu0
        %1279 = vmatprep.mubr.bf16.mxu0 0
        %1280 = vmatmul.mubr.bf16.gmra.mrb[0].mxu0 %v1062
        %v1281 = vpop.f32.mrb[0].mxu0
        %v1282 = vadd.f32 %v1085, %v1281
        %v1283 = vpop.f32.mrb[0].mxu0
        %v1284 = vpop.f32.mrb[0].mxu0
        %v1285 = vadd.f32 %v1085, %v1284
        %v1286 = vpop.f32.mrb[0].mxu0
        %1287 = vmatprep.mubr.bf16.mxu0 0
        %1288 = vmatmul.mubr.bf16.gmra.mrb[0].mxu0 %v1063
        %v1289 = vpop.f32.mrb[0].mxu0
        %v1290 = vadd.f32 %v1085, %v1289
        %v1291 = vpop.f32.mrb[0].mxu0
        %v1292 = vpop.f32.mrb[0].mxu0
        %v1293 = vadd.f32 %v1085, %v1292
        %v1294 = vpop.f32.mrb[0].mxu0
        %1295 = vdwg.mxu0
        %v1296 = vpack.c.bf16 %v1173, %v1170
        %v1297 = vpack.c.bf16 %v1181, %v1178
        %v1298 = vpack.c.bf16 %v1189, %v1186
        %v1299 = vpack.c.bf16 %v1197, %v1194
        %v1300 = vpack.c.bf16 %v1205, %v1202
        %v1301 = vpack.c.bf16 %v1213, %v1210
        %v1302 = vpack.c.bf16 %v1221, %v1218
        %v1303 = vpack.c.bf16 %v1229, %v1226
        %v1304 = vpack.c.bf16 %v1237, %v1234
        %v1305 = vpack.c.bf16 %v1245, %v1242
        %v1306 = vpack.c.bf16 %v1253, %v1250
        %v1307 = vpack.c.bf16 %v1261, %v1258
        %v1308 = vpack.c.bf16 %v1269, %v1266
        %v1309 = vpack.c.bf16 %v1277, %v1274
        %v1310 = vpack.c.bf16 %v1285, %v1282
        %v1311 = vpack.c.bf16 %v1293, %v1290
        %v1312 = vld [vmem:[#allocation10] sm:$0xf]
        %v1313 = vld [vmem:[#allocation10 + $0x4] sm:$0xf]
        %v1314 = vld [vmem:[#allocation10 + $0x8] sm:$0xf]
        %v1315 = vld [vmem:[#allocation10 + $0xc] sm:$0xf]
        %v1316 = vld [vmem:[#allocation10 + $0x10] sm:$0xf]
        %v1317 = vld [vmem:[#allocation10 + $0x14] sm:$0xf]
        %v1318 = vld [vmem:[#allocation10 + $0x18] sm:$0xf]
        %v1319 = vld [vmem:[#allocation10 + $0x1c] sm:$0xf]
        %v1320 = vld [vmem:[#allocation10 + $0x20] sm:$0xf]
        %v1321 = vld [vmem:[#allocation10 + $0x24] sm:$0xf]
        %v1322 = vld [vmem:[#allocation10 + $0x28] sm:$0xf]
        %v1323 = vld [vmem:[#allocation10 + $0x2c] sm:$0xf]
        %v1324 = vld [vmem:[#allocation10 + $0x30] sm:$0xf]
        %v1325 = vld [vmem:[#allocation10 + $0x34] sm:$0xf]
        %v1326 = vld [vmem:[#allocation10 + $0x38] sm:$0xf]
        %v1327 = vld [vmem:[#allocation10 + $0x3c] sm:$0xf]
        %v1328 = vld [vmem:[%s7] sm:$0x1]
        %v1330 = vlaneseq
        %v1331 = vshrl.u32 %v1330, 7
        %v1332 = vsub.s32 0, %v1331
        %v1333 = vrot.slane %v1328, %v1332
        %v1351 = vunpack.c.l.b16 %v1312
        %v1352 = vunpack.c.l.b16 %v1313
        %v1353 = vunpack.c.l.b16 %v1314
        %v1354 = vunpack.c.l.b16 %v1315
        %v1355 = vunpack.c.l.b16 %v1316
        %v1356 = vunpack.c.l.b16 %v1317
        %v1357 = vunpack.c.l.b16 %v1318
        %v1358 = vunpack.c.l.b16 %v1319
        %v1359 = vunpack.c.l.b16 %v1320
        %v1360 = vunpack.c.l.b16 %v1321
        %v1361 = vunpack.c.l.b16 %v1322
        %v1362 = vunpack.c.l.b16 %v1323
        %v1363 = vunpack.c.l.b16 %v1324
        %v1364 = vunpack.c.l.b16 %v1325
        %v1365 = vunpack.c.l.b16 %v1326
        %v1366 = vunpack.c.l.b16 %v1327
        %v1367 = vpack.c.b16 %v1352, %v1351
        %v1368 = vpack.c.b16 %v1354, %v1353
        %v1369 = vpack.c.b16 %v1356, %v1355
        %v1370 = vpack.c.b16 %v1358, %v1357
        %v1371 = vpack.c.b16 %v1360, %v1359
        %v1372 = vpack.c.b16 %v1362, %v1361
        %v1373 = vpack.c.b16 %v1364, %v1363
        %v1374 = vpack.c.b16 %v1366, %v1365
        %1383 = vmatprep.subr.bf16.mxu0 0
        %1384 = vmatpush1.bf16.msra.mxu0 %v1367
        %1385 = vmatprep.subr.bf16.mxu0 0
        %1386 = vmatpush1.bf16.msra.mxu0 %v1368
        %1387 = vmatprep.subr.bf16.mxu0 0
        %1388 = vmatpush1.bf16.msra.mxu0 %v1369
        %1389 = vmatprep.subr.bf16.mxu0 0
        %1390 = vmatpush1.bf16.msra.mxu0 %v1370
        %1391 = vmatprep.subr.bf16.mxu0 0
        %1392 = vmatpush1.bf16.msra.mxu0 %v1371
        %1393 = vmatprep.subr.bf16.mxu0 0
        %1394 = vmatpush1.bf16.msra.mxu0 %v1372
        %1395 = vmatprep.subr.bf16.mxu0 0
        %1396 = vmatpush1.bf16.msra.mxu0 %v1373
        %1397 = vmatprep.subr.bf16.mxu0 0
        %1398 = vmatpush1.bf16.msra.mxu0 %v1374
        %1399 = vmatprep.subr.bf16.mxu0 0
        %1400 = vmatpush1.bf16.msra.mxu0 0
        %1401 = vmatprep.subr.bf16.mxu0 0
        %1402 = vmatpush1.bf16.msra.mxu0 0
        %1403 = vmatprep.subr.bf16.mxu0 0
        %1404 = vmatpush1.bf16.msra.mxu0 0
        %1405 = vmatprep.subr.bf16.mxu0 0
        %1406 = vmatpush1.bf16.msra.mxu0 0
        %1407 = vmatprep.subr.bf16.mxu0 0
        %1408 = vmatpush1.bf16.msra.mxu0 0
        %1409 = vmatprep.subr.bf16.mxu0 0
        %1410 = vmatpush1.bf16.msra.mxu0 0
        %1411 = vmatprep.subr.bf16.mxu0 0
        %1412 = vmatpush1.bf16.msra.mxu0 0
        %1413 = vmatprep.subr.bf16.mxu0 0
        %1414 = vmatpush1.bf16.msra.mxu0 0
        %1415 = vmatprep.mubr.bf16.mxu0 0
        %1416 = vmatmul.mubr.bf16.gmra.mrb[0].mxu0 %v1296
        %v1417 = vpop.f32.mrb[0].mxu0
        %v1418 = vadd.f32 %v1333, %v1417
        %v1419 = vpop.f32.mrb[0].mxu0
        %v1420 = vpop.f32.mrb[0].mxu0
        %v1421 = vadd.f32 %v1333, %v1420
        %v1422 = vpop.f32.mrb[0].mxu0
        %1423 = vmatprep.mubr.bf16.mxu0 0
        %1424 = vmatmul.mubr.bf16.gmra.mrb[0].mxu0 %v1297
        %v1425 = vpop.f32.mrb[0].mxu0
        %v1426 = vadd.f32 %v1333, %v1425
        %v1427 = vpop.f32.mrb[0].mxu0
        %v1428 = vpop.f32.mrb[0].mxu0
        %v1429 = vadd.f32 %v1333, %v1428
        %v1430 = vpop.f32.mrb[0].mxu0
        %1431 = vmatprep.mubr.bf16.mxu0 0
        %1432 = vmatmul.mubr.bf16.gmra.mrb[0].mxu0 %v1298
        %v1433 = vpop.f32.mrb[0].mxu0
        %v1434 = vadd.f32 %v1333, %v1433
        %v1435 = vpop.f32.mrb[0].mxu0
        %v1436 = vpop.f32.mrb[0].mxu0
        %v1437 = vadd.f32 %v1333, %v1436
        %v1438 = vpop.f32.mrb[0].mxu0
        %1439 = vmatprep.mubr.bf16.mxu0 0
        %1440 = vmatmul.mubr.bf16.gmra.mrb[0].mxu0 %v1299
        %v1441 = vpop.f32.mrb[0].mxu0
        %v1442 = vadd.f32 %v1333, %v1441
        %v1443 = vpop.f32.mrb[0].mxu0
        %v1444 = vpop.f32.mrb[0].mxu0
        %v1445 = vadd.f32 %v1333, %v1444
        %v1446 = vpop.f32.mrb[0].mxu0
        %1447 = vmatprep.mubr.bf16.mxu0 0
        %1448 = vmatmul.mubr.bf16.gmra.mrb[0].mxu0 %v1300
        %v1449 = vpop.f32.mrb[0].mxu0
        %v1450 = vadd.f32 %v1333, %v1449
        %v1451 = vpop.f32.mrb[0].mxu0
        %v1452 = vpop.f32.mrb[0].mxu0
        %v1453 = vadd.f32 %v1333, %v1452
        %v1454 = vpop.f32.mrb[0].mxu0
        %1455 = vmatprep.mubr.bf16.mxu0 0
        %1456 = vmatmul.mubr.bf16.gmra.mrb[0].mxu0 %v1301
        %v1457 = vpop.f32.mrb[0].mxu0
        %v1458 = vadd.f32 %v1333, %v1457
        %v1459 = vpop.f32.mrb[0].mxu0
        %v1460 = vpop.f32.mrb[0].mxu0
        %v1461 = vadd.f32 %v1333, %v1460
        %v1462 = vpop.f32.mrb[0].mxu0
        %1463 = vmatprep.mubr.bf16.mxu0 0
        %1464 = vmatmul.mubr.bf16.gmra.mrb[0].mxu0 %v1302
        %v1465 = vpop.f32.mrb[0].mxu0
        %v1466 = vadd.f32 %v1333, %v1465
        %v1467 = vpop.f32.mrb[0].mxu0
        %v1468 = vpop.f32.mrb[0].mxu0
        %v1469 = vadd.f32 %v1333, %v1468
        %v1470 = vpop.f32.mrb[0].mxu0
        %1471 = vmatprep.mubr.bf16.mxu0 0
        %1472 = vmatmul.mubr.bf16.gmra.mrb[0].mxu0 %v1303
        %v1473 = vpop.f32.mrb[0].mxu0
        %v1474 = vadd.f32 %v1333, %v1473
        %v1475 = vpop.f32.mrb[0].mxu0
        %v1476 = vpop.f32.mrb[0].mxu0
        %v1477 = vadd.f32 %v1333, %v1476
        %v1478 = vpop.f32.mrb[0].mxu0
        %1479 = vmatprep.mubr.bf16.mxu0 0
        %1480 = vmatmul.mubr.bf16.gmra.mrb[0].mxu0 %v1304
        %v1481 = vpop.f32.mrb[0].mxu0
        %v1482 = vadd.f32 %v1333, %v1481
        %v1483 = vpop.f32.mrb[0].mxu0
        %v1484 = vpop.f32.mrb[0].mxu0
        %v1485 = vadd.f32 %v1333, %v1484
        %v1486 = vpop.f32.mrb[0].mxu0
        %1487 = vmatprep.mubr.bf16.mxu0 0
        %1488 = vmatmul.mubr.bf16.gmra.mrb[0].mxu0 %v1305
        %v1489 = vpop.f32.mrb[0].mxu0
        %v1490 = vadd.f32 %v1333, %v1489
        %v1491 = vpop.f32.mrb[0].mxu0
        %v1492 = vpop.f32.mrb[0].mxu0
        %v1493 = vadd.f32 %v1333, %v1492
        %v1494 = vpop.f32.mrb[0].mxu0
        %1495 = vmatprep.mubr.bf16.mxu0 0
        %1496 = vmatmul.mubr.bf16.gmra.mrb[0].mxu0 %v1306
        %v1497 = vpop.f32.mrb[0].mxu0
        %v1498 = vadd.f32 %v1333, %v1497
        %v1499 = vpop.f32.mrb[0].mxu0
        %v1500 = vpop.f32.mrb[0].mxu0
        %v1501 = vadd.f32 %v1333, %v1500
        %v1502 = vpop.f32.mrb[0].mxu0
        %1503 = vmatprep.mubr.bf16.mxu0 0
        %1504 = vmatmul.mubr.bf16.gmra.mrb[0].mxu0 %v1307
        %v1505 = vpop.f32.mrb[0].mxu0
        %v1506 = vadd.f32 %v1333, %v1505
        %v1507 = vpop.f32.mrb[0].mxu0
        %v1508 = vpop.f32.mrb[0].mxu0
        %v1509 = vadd.f32 %v1333, %v1508
        %v1510 = vpop.f32.mrb[0].mxu0
        %1511 = vmatprep.mubr.bf16.mxu0 0
        %1512 = vmatmul.mubr.bf16.gmra.mrb[0].mxu0 %v1308
        %v1513 = vpop.f32.mrb[0].mxu0
        %v1514 = vadd.f32 %v1333, %v1513
        %v1515 = vpop.f32.mrb[0].mxu0
        %v1516 = vpop.f32.mrb[0].mxu0
        %v1517 = vadd.f32 %v1333, %v1516
        %v1518 = vpop.f32.mrb[0].mxu0
        %1519 = vmatprep.mubr.bf16.mxu0 0
        %1520 = vmatmul.mubr.bf16.gmra.mrb[0].mxu0 %v1309
        %v1521 = vpop.f32.mrb[0].mxu0
        %v1522 = vadd.f32 %v1333, %v1521
        %v1523 = vpop.f32.mrb[0].mxu0
        %v1524 = vpop.f32.mrb[0].mxu0
        %v1525 = vadd.f32 %v1333, %v1524
        %v1526 = vpop.f32.mrb[0].mxu0
        %1527 = vmatprep.mubr.bf16.mxu0 0
        %1528 = vmatmul.mubr.bf16.gmra.mrb[0].mxu0 %v1310
        %v1529 = vpop.f32.mrb[0].mxu0
        %v1530 = vadd.f32 %v1333, %v1529
        %v1531 = vpop.f32.mrb[0].mxu0
        %v1532 = vpop.f32.mrb[0].mxu0
        %v1533 = vadd.f32 %v1333, %v1532
        %v1534 = vpop.f32.mrb[0].mxu0
        %1535 = vmatprep.mubr.bf16.mxu0 0
        %1536 = vmatmul.mubr.bf16.gmra.mrb[0].mxu0 %v1311
        %v1537 = vpop.f32.mrb[0].mxu0
        %v1538 = vadd.f32 %v1333, %v1537
        %v1539 = vpop.f32.mrb[0].mxu0
        %v1540 = vpop.f32.mrb[0].mxu0
        %v1541 = vadd.f32 %v1333, %v1540
        %v1542 = vpop.f32.mrb[0].mxu0
        %1543 = vdwg.mxu0
        %v1544 = vmax.f32 %v1418, 0.0
        %v1545 = vmax.f32 %v1421, 0.0
        %v1546 = vmax.f32 %v1426, 0.0
        %v1547 = vmax.f32 %v1429, 0.0
        %v1548 = vmax.f32 %v1434, 0.0
        %v1549 = vmax.f32 %v1437, 0.0
        %v1550 = vmax.f32 %v1442, 0.0
        %v1551 = vmax.f32 %v1445, 0.0
        %v1552 = vmax.f32 %v1450, 0.0
        %v1553 = vmax.f32 %v1453, 0.0
        %v1554 = vmax.f32 %v1458, 0.0
        %v1555 = vmax.f32 %v1461, 0.0
        %v1556 = vmax.f32 %v1466, 0.0
        %v1557 = vmax.f32 %v1469, 0.0
        %v1558 = vmax.f32 %v1474, 0.0
        %v1559 = vmax.f32 %v1477, 0.0
        %v1560 = vmax.f32 %v1482, 0.0
        %v1561 = vmax.f32 %v1485, 0.0
        %v1562 = vmax.f32 %v1490, 0.0
        %v1563 = vmax.f32 %v1493, 0.0
        %v1564 = vmax.f32 %v1498, 0.0
        %v1565 = vmax.f32 %v1501, 0.0
        %v1566 = vmax.f32 %v1506, 0.0
        %v1567 = vmax.f32 %v1509, 0.0
        %v1568 = vmax.f32 %v1514, 0.0
        %v1569 = vmax.f32 %v1517, 0.0
        %v1570 = vmax.f32 %v1522, 0.0
        %v1571 = vmax.f32 %v1525, 0.0
        %v1572 = vmax.f32 %v1530, 0.0
        %v1573 = vmax.f32 %v1533, 0.0
        %v1574 = vmax.f32 %v1538, 0.0
        %v1575 = vmax.f32 %v1541, 0.0
        %v1576 = vpack.c.bf16 %v1545, %v1544
        %v1577 = vpack.c.bf16 %v1547, %v1546
        %v1578 = vpack.c.bf16 %v1549, %v1548
        %v1579 = vpack.c.bf16 %v1551, %v1550
        %v1580 = vpack.c.bf16 %v1553, %v1552
        %v1581 = vpack.c.bf16 %v1555, %v1554
        %v1582 = vpack.c.bf16 %v1557, %v1556
        %v1583 = vpack.c.bf16 %v1559, %v1558
        %v1584 = vpack.c.bf16 %v1561, %v1560
        %v1585 = vpack.c.bf16 %v1563, %v1562
        %v1586 = vpack.c.bf16 %v1565, %v1564
        %v1587 = vpack.c.bf16 %v1567, %v1566
        %v1588 = vpack.c.bf16 %v1569, %v1568
        %v1589 = vpack.c.bf16 %v1571, %v1570
        %v1590 = vpack.c.bf16 %v1573, %v1572
        %v1591 = vpack.c.bf16 %v1575, %v1574
        %v1592 = vld [vmem:[#allocation11] sm:$0xf]
        %v1593 = vld [vmem:[#allocation11 + $0x4] sm:$0xf]
        %v1594 = vld [vmem:[#allocation11 + $0x8] sm:$0xf]
        %v1595 = vld [vmem:[#allocation11 + $0xc] sm:$0xf]
        %v1596 = vld [vmem:[#allocation11 + $0x10] sm:$0xf]
        %v1597 = vld [vmem:[#allocation11 + $0x14] sm:$0xf]
        %v1598 = vld [vmem:[#allocation11 + $0x18] sm:$0xf]
        %v1599 = vld [vmem:[#allocation11 + $0x1c] sm:$0xf]
        %v1600 = vld [vmem:[#allocation11 + $0x20] sm:$0xf]
        %v1601 = vld [vmem:[#allocation11 + $0x24] sm:$0xf]
        %v1602 = vld [vmem:[#allocation11 + $0x28] sm:$0xf]
        %v1603 = vld [vmem:[#allocation11 + $0x2c] sm:$0xf]
        %v1604 = vld [vmem:[#allocation11 + $0x30] sm:$0xf]
        %v1605 = vld [vmem:[#allocation11 + $0x34] sm:$0xf]
        %v1606 = vld [vmem:[#allocation11 + $0x38] sm:$0xf]
        %v1607 = vld [vmem:[#allocation11 + $0x3c] sm:$0xf]
        %v1608 = vld [vmem:[%s9] sm:$0x1]
        %v1610 = vlaneseq
        %v1611 = vshrl.u32 %v1610, 7
        %v1612 = vsub.s32 0, %v1611
        %v1613 = vrot.slane %v1608, %v1612
        %v1631 = vunpack.c.l.b16 %v1592
        %v1632 = vunpack.c.l.b16 %v1593
        %v1633 = vunpack.c.l.b16 %v1594
        %v1634 = vunpack.c.l.b16 %v1595
        %v1635 = vunpack.c.l.b16 %v1596
        %v1636 = vunpack.c.l.b16 %v1597
        %v1637 = vunpack.c.l.b16 %v1598
        %v1638 = vunpack.c.l.b16 %v1599
        %v1639 = vunpack.c.l.b16 %v1600
        %v1640 = vunpack.c.l.b16 %v1601
        %v1641 = vunpack.c.l.b16 %v1602
        %v1642 = vunpack.c.l.b16 %v1603
        %v1643 = vunpack.c.l.b16 %v1604
        %v1644 = vunpack.c.l.b16 %v1605
        %v1645 = vunpack.c.l.b16 %v1606
        %v1646 = vunpack.c.l.b16 %v1607
        %v1647 = vpack.c.b16 %v1632, %v1631
        %v1648 = vpack.c.b16 %v1634, %v1633
        %v1649 = vpack.c.b16 %v1636, %v1635
        %v1650 = vpack.c.b16 %v1638, %v1637
        %v1651 = vpack.c.b16 %v1640, %v1639
        %v1652 = vpack.c.b16 %v1642, %v1641
        %v1653 = vpack.c.b16 %v1644, %v1643
        %v1654 = vpack.c.b16 %v1646, %v1645
        %1663 = vmatprep.subr.bf16.mxu0 0
        %1664 = vmatpush1.bf16.msra.mxu0 %v1647
        %1665 = vmatprep.subr.bf16.mxu0 0
        %1666 = vmatpush1.bf16.msra.mxu0 %v1648
        %1667 = vmatprep.subr.bf16.mxu0 0
        %1668 = vmatpush1.bf16.msra.mxu0 %v1649
        %1669 = vmatprep.subr.bf16.mxu0 0
        %1670 = vmatpush1.bf16.msra.mxu0 %v1650
        %1671 = vmatprep.subr.bf16.mxu0 0
        %1672 = vmatpush1.bf16.msra.mxu0 %v1651
        %1673 = vmatprep.subr.bf16.mxu0 0
        %1674 = vmatpush1.bf16.msra.mxu0 %v1652
        %1675 = vmatprep.subr.bf16.mxu0 0
        %1676 = vmatpush1.bf16.msra.mxu0 %v1653
        %1677 = vmatprep.subr.bf16.mxu0 0
        %1678 = vmatpush1.bf16.msra.mxu0 %v1654
        %1679 = vmatprep.subr.bf16.mxu0 0
        %1680 = vmatpush1.bf16.msra.mxu0 0
        %1681 = vmatprep.subr.bf16.mxu0 0
        %1682 = vmatpush1.bf16.msra.mxu0 0
        %1683 = vmatprep.subr.bf16.mxu0 0
        %1684 = vmatpush1.bf16.msra.mxu0 0
        %1685 = vmatprep.subr.bf16.mxu0 0
        %1686 = vmatpush1.bf16.msra.mxu0 0
        %1687 = vmatprep.subr.bf16.mxu0 0
        %1688 = vmatpush1.bf16.msra.mxu0 0
        %1689 = vmatprep.subr.bf16.mxu0 0
        %1690 = vmatpush1.bf16.msra.mxu0 0
        %1691 = vmatprep.subr.bf16.mxu0 0
        %1692 = vmatpush1.bf16.msra.mxu0 0
        %1693 = vmatprep.subr.bf16.mxu0 0
        %1694 = vmatpush1.bf16.msra.mxu0 0
        %1695 = vmatprep.mubr.bf16.mxu0 0
        %1696 = vmatmul.mubr.bf16.gmra.mrb[0].mxu0 %v1576
        %v1697 = vpop.f32.mrb[0].mxu0
        %v1698 = vadd.f32 %v1613, %v1697
        %v1699 = vpop.f32.mrb[0].mxu0
        %v1700 = vpop.f32.mrb[0].mxu0
        %v1701 = vadd.f32 %v1613, %v1700
        %v1702 = vpop.f32.mrb[0].mxu0
        %1703 = vmatprep.mubr.bf16.mxu0 0
        %1704 = vmatmul.mubr.bf16.gmra.mrb[0].mxu0 %v1577
        %v1705 = vpop.f32.mrb[0].mxu0
        %v1706 = vadd.f32 %v1613, %v1705
        %v1707 = vpop.f32.mrb[0].mxu0
        %v1708 = vpop.f32.mrb[0].mxu0
        %v1709 = vadd.f32 %v1613, %v1708
        %v1710 = vpop.f32.mrb[0].mxu0
        %1711 = vmatprep.mubr.bf16.mxu0 0
        %1712 = vmatmul.mubr.bf16.gmra.mrb[0].mxu0 %v1578
        %v1713 = vpop.f32.mrb[0].mxu0
        %v1714 = vadd.f32 %v1613, %v1713
        %v1715 = vpop.f32.mrb[0].mxu0
        %v1716 = vpop.f32.mrb[0].mxu0
        %v1717 = vadd.f32 %v1613, %v1716
        %v1718 = vpop.f32.mrb[0].mxu0
        %1719 = vmatprep.mubr.bf16.mxu0 0
        %1720 = vmatmul.mubr.bf16.gmra.mrb[0].mxu0 %v1579
        %v1721 = vpop.f32.mrb[0].mxu0
        %v1722 = vadd.f32 %v1613, %v1721
        %v1723 = vpop.f32.mrb[0].mxu0
        %v1724 = vpop.f32.mrb[0].mxu0
        %v1725 = vadd.f32 %v1613, %v1724
        %v1726 = vpop.f32.mrb[0].mxu0
        %1727 = vmatprep.mubr.bf16.mxu0 0
        %1728 = vmatmul.mubr.bf16.gmra.mrb[0].mxu0 %v1580
        %v1729 = vpop.f32.mrb[0].mxu0
        %v1730 = vadd.f32 %v1613, %v1729
        %v1731 = vpop.f32.mrb[0].mxu0
        %v1732 = vpop.f32.mrb[0].mxu0
        %v1733 = vadd.f32 %v1613, %v1732
        %v1734 = vpop.f32.mrb[0].mxu0
        %1735 = vmatprep.mubr.bf16.mxu0 0
        %1736 = vmatmul.mubr.bf16.gmra.mrb[0].mxu0 %v1581
        %v1737 = vpop.f32.mrb[0].mxu0
        %v1738 = vadd.f32 %v1613, %v1737
        %v1739 = vpop.f32.mrb[0].mxu0
        %v1740 = vpop.f32.mrb[0].mxu0
        %v1741 = vadd.f32 %v1613, %v1740
        %v1742 = vpop.f32.mrb[0].mxu0
        %1743 = vmatprep.mubr.bf16.mxu0 0
        %1744 = vmatmul.mubr.bf16.gmra.mrb[0].mxu0 %v1582
        %v1745 = vpop.f32.mrb[0].mxu0
        %v1746 = vadd.f32 %v1613, %v1745
        %v1747 = vpop.f32.mrb[0].mxu0
        %v1748 = vpop.f32.mrb[0].mxu0
        %v1749 = vadd.f32 %v1613, %v1748
        %v1750 = vpop.f32.mrb[0].mxu0
        %1751 = vmatprep.mubr.bf16.mxu0 0
        %1752 = vmatmul.mubr.bf16.gmra.mrb[0].mxu0 %v1583
        %v1753 = vpop.f32.mrb[0].mxu0
        %v1754 = vadd.f32 %v1613, %v1753
        %v1755 = vpop.f32.mrb[0].mxu0
        %v1756 = vpop.f32.mrb[0].mxu0
        %v1757 = vadd.f32 %v1613, %v1756
        %v1758 = vpop.f32.mrb[0].mxu0
        %1759 = vmatprep.mubr.bf16.mxu0 0
        %1760 = vmatmul.mubr.bf16.gmra.mrb[0].mxu0 %v1584
        %v1761 = vpop.f32.mrb[0].mxu0
        %v1762 = vadd.f32 %v1613, %v1761
        %v1763 = vpop.f32.mrb[0].mxu0
        %v1764 = vpop.f32.mrb[0].mxu0
        %v1765 = vadd.f32 %v1613, %v1764
        %v1766 = vpop.f32.mrb[0].mxu0
        %1767 = vmatprep.mubr.bf16.mxu0 0
        %1768 = vmatmul.mubr.bf16.gmra.mrb[0].mxu0 %v1585
        %v1769 = vpop.f32.mrb[0].mxu0
        %v1770 = vadd.f32 %v1613, %v1769
        %v1771 = vpop.f32.mrb[0].mxu0
        %v1772 = vpop.f32.mrb[0].mxu0
        %v1773 = vadd.f32 %v1613, %v1772
        %v1774 = vpop.f32.mrb[0].mxu0
        %1775 = vmatprep.mubr.bf16.mxu0 0
        %1776 = vmatmul.mubr.bf16.gmra.mrb[0].mxu0 %v1586
        %v1777 = vpop.f32.mrb[0].mxu0
        %v1778 = vadd.f32 %v1613, %v1777
        %v1779 = vpop.f32.mrb[0].mxu0
        %v1780 = vpop.f32.mrb[0].mxu0
        %v1781 = vadd.f32 %v1613, %v1780
        %v1782 = vpop.f32.mrb[0].mxu0
        %1783 = vmatprep.mubr.bf16.mxu0 0
        %1784 = vmatmul.mubr.bf16.gmra.mrb[0].mxu0 %v1587
        %v1785 = vpop.f32.mrb[0].mxu0
        %v1786 = vadd.f32 %v1613, %v1785
        %v1787 = vpop.f32.mrb[0].mxu0
        %v1788 = vpop.f32.mrb[0].mxu0
        %v1789 = vadd.f32 %v1613, %v1788
        %v1790 = vpop.f32.mrb[0].mxu0
        %1791 = vmatprep.mubr.bf16.mxu0 0
        %1792 = vmatmul.mubr.bf16.gmra.mrb[0].mxu0 %v1588
        %v1793 = vpop.f32.mrb[0].mxu0
        %v1794 = vadd.f32 %v1613, %v1793
        %v1795 = vpop.f32.mrb[0].mxu0
        %v1796 = vpop.f32.mrb[0].mxu0
        %v1797 = vadd.f32 %v1613, %v1796
        %v1798 = vpop.f32.mrb[0].mxu0
        %1799 = vmatprep.mubr.bf16.mxu0 0
        %1800 = vmatmul.mubr.bf16.gmra.mrb[0].mxu0 %v1589
        %v1801 = vpop.f32.mrb[0].mxu0
        %v1802 = vadd.f32 %v1613, %v1801
        %v1803 = vpop.f32.mrb[0].mxu0
        %v1804 = vpop.f32.mrb[0].mxu0
        %v1805 = vadd.f32 %v1613, %v1804
        %v1806 = vpop.f32.mrb[0].mxu0
        %1807 = vmatprep.mubr.bf16.mxu0 0
        %1808 = vmatmul.mubr.bf16.gmra.mrb[0].mxu0 %v1590
        %v1809 = vpop.f32.mrb[0].mxu0
        %v1810 = vadd.f32 %v1613, %v1809
        %v1811 = vpop.f32.mrb[0].mxu0
        %v1812 = vpop.f32.mrb[0].mxu0
        %v1813 = vadd.f32 %v1613, %v1812
        %v1814 = vpop.f32.mrb[0].mxu0
        %1815 = vmatprep.mubr.bf16.mxu0 0
        %1816 = vmatmul.mubr.bf16.gmra.mrb[0].mxu0 %v1591
        %v1817 = vpop.f32.mrb[0].mxu0
        %v1818 = vadd.f32 %v1613, %v1817
        %v1819 = vpop.f32.mrb[0].mxu0
        %v1820 = vpop.f32.mrb[0].mxu0
        %v1821 = vadd.f32 %v1613, %v1820
        %v1822 = vpop.f32.mrb[0].mxu0
        %1823 = vdwg.mxu0
        %v1824 = vpack.c.bf16 %v1701, %v1698
        %v1825 = vpack.c.bf16 %v1709, %v1706
        %v1826 = vpack.c.bf16 %v1717, %v1714
        %v1827 = vpack.c.bf16 %v1725, %v1722
        %v1828 = vpack.c.bf16 %v1733, %v1730
        %v1829 = vpack.c.bf16 %v1741, %v1738
        %v1830 = vpack.c.bf16 %v1749, %v1746
        %v1831 = vpack.c.bf16 %v1757, %v1754
        %v1832 = vpack.c.bf16 %v1765, %v1762
        %v1833 = vpack.c.bf16 %v1773, %v1770
        %v1834 = vpack.c.bf16 %v1781, %v1778
        %v1835 = vpack.c.bf16 %v1789, %v1786
        %v1836 = vpack.c.bf16 %v1797, %v1794
        %v1837 = vpack.c.bf16 %v1805, %v1802
        %v1838 = vpack.c.bf16 %v1813, %v1810
        %v1839 = vpack.c.bf16 %v1821, %v1818
        %v1856 = vunpack.c.l.b16 %v1824
        %v1857 = vunpack.c.h.b16 %v1824
        %v1858 = vunpack.c.l.b16 %v1825
        %v1859 = vunpack.c.h.b16 %v1825
        %v1860 = vunpack.c.l.b16 %v1826
        %v1861 = vunpack.c.h.b16 %v1826
        %v1862 = vunpack.c.l.b16 %v1827
        %v1863 = vunpack.c.h.b16 %v1827
        %v1864 = vunpack.c.l.b16 %v1828
        %v1865 = vunpack.c.h.b16 %v1828
        %v1866 = vunpack.c.l.b16 %v1829
        %v1867 = vunpack.c.h.b16 %v1829
        %v1868 = vunpack.c.l.b16 %v1830
        %v1869 = vunpack.c.h.b16 %v1830
        %v1870 = vunpack.c.l.b16 %v1831
        %v1871 = vunpack.c.h.b16 %v1831
        %v1872 = vunpack.c.l.b16 %v1832
        %v1873 = vunpack.c.h.b16 %v1832
        %v1874 = vunpack.c.l.b16 %v1833
        %v1875 = vunpack.c.h.b16 %v1833
        %v1876 = vunpack.c.l.b16 %v1834
        %v1877 = vunpack.c.h.b16 %v1834
        %v1878 = vunpack.c.l.b16 %v1835
        %v1879 = vunpack.c.h.b16 %v1835
        %v1880 = vunpack.c.l.b16 %v1836
        %v1881 = vunpack.c.h.b16 %v1836
        %v1882 = vunpack.c.l.b16 %v1837
        %v1883 = vunpack.c.h.b16 %v1837
        %v1884 = vunpack.c.l.b16 %v1838
        %v1885 = vunpack.c.h.b16 %v1838
        %v1886 = vunpack.c.l.b16 %v1839
        %v1887 = vunpack.c.h.b16 %v1839
        %v1888 = vpack.c.b16 %v1856, %v1856
        %v1889 = vpack.c.b16 %v1857, %v1857
        %v1890 = vpack.c.b16 %v1858, %v1858
        %v1891 = vpack.c.b16 %v1859, %v1859
        %v1892 = vpack.c.b16 %v1860, %v1860
        %v1893 = vpack.c.b16 %v1861, %v1861
        %v1894 = vpack.c.b16 %v1862, %v1862
        %v1895 = vpack.c.b16 %v1863, %v1863
        %v1896 = vpack.c.b16 %v1864, %v1864
        %v1897 = vpack.c.b16 %v1865, %v1865
        %v1898 = vpack.c.b16 %v1866, %v1866
        %v1899 = vpack.c.b16 %v1867, %v1867
        %v1900 = vpack.c.b16 %v1868, %v1868
        %v1901 = vpack.c.b16 %v1869, %v1869
        %v1902 = vpack.c.b16 %v1870, %v1870
        %v1903 = vpack.c.b16 %v1871, %v1871
        %v1904 = vpack.c.b16 %v1872, %v1872
        %v1905 = vpack.c.b16 %v1873, %v1873
        %v1906 = vpack.c.b16 %v1874, %v1874
        %v1907 = vpack.c.b16 %v1875, %v1875
        %v1908 = vpack.c.b16 %v1876, %v1876
        %v1909 = vpack.c.b16 %v1877, %v1877
        %v1910 = vpack.c.b16 %v1878, %v1878
        %v1911 = vpack.c.b16 %v1879, %v1879
        %v1912 = vpack.c.b16 %v1880, %v1880
        %v1913 = vpack.c.b16 %v1881, %v1881
        %v1914 = vpack.c.b16 %v1882, %v1882
        %v1915 = vpack.c.b16 %v1883, %v1883
        %v1916 = vpack.c.b16 %v1884, %v1884
        %v1917 = vpack.c.b16 %v1885, %v1885
        %v1918 = vpack.c.b16 %v1886, %v1886
        %v1919 = vpack.c.b16 %v1887, %v1887
        %1952 = vst [vmem:[%s643] sm:$0xf] %v1888
        %1953 = vst [vmem:[%s643 + $0x4] sm:$0xf] %v1889
        %1954 = vst [vmem:[%s643 + $0x8] sm:$0xf] %v1890
        %1955 = vst [vmem:[%s643 + $0xc] sm:$0xf] %v1891
        %1956 = vst [vmem:[%s643 + $0x10] sm:$0xf] %v1892
        %1957 = vst [vmem:[%s643 + $0x14] sm:$0xf] %v1893
        %1958 = vst [vmem:[%s643 + $0x18] sm:$0xf] %v1894
        %1959 = vst [vmem:[%s643 + $0x1c] sm:$0xf] %v1895
        %1960 = vst [vmem:[%s643 + $0x20] sm:$0xf] %v1896
        %1961 = vst [vmem:[%s643 + $0x24] sm:$0xf] %v1897
        %1962 = vst [vmem:[%s643 + $0x28] sm:$0xf] %v1898
        %1963 = vst [vmem:[%s643 + $0x2c] sm:$0xf] %v1899
        %1964 = vst [vmem:[%s643 + $0x30] sm:$0xf] %v1900
        %1965 = vst [vmem:[%s643 + $0x34] sm:$0xf] %v1901
        %1966 = vst [vmem:[%s643 + $0x38] sm:$0xf] %v1902
        %1967 = vst [vmem:[%s643 + $0x3c] sm:$0xf] %v1903
        %1968 = vst [vmem:[%s643 + $0x40] sm:$0xf] %v1904
        %1969 = vst [vmem:[%s643 + $0x44] sm:$0xf] %v1905
        %1970 = vst [vmem:[%s643 + $0x48] sm:$0xf] %v1906
        %1971 = vst [vmem:[%s643 + $0x4c] sm:$0xf] %v1907
        %1972 = vst [vmem:[%s643 + $0x50] sm:$0xf] %v1908
        %1973 = vst [vmem:[%s643 + $0x54] sm:$0xf] %v1909
        %1974 = vst [vmem:[%s643 + $0x58] sm:$0xf] %v1910
        %1975 = vst [vmem:[%s643 + $0x5c] sm:$0xf] %v1911
        %1976 = vst [vmem:[%s643 + $0x60] sm:$0xf] %v1912
        %1977 = vst [vmem:[%s643 + $0x64] sm:$0xf] %v1913
        %1978 = vst [vmem:[%s643 + $0x68] sm:$0xf] %v1914
        %1979 = vst [vmem:[%s643 + $0x6c] sm:$0xf] %v1915
        %1980 = vst [vmem:[%s643 + $0x70] sm:$0xf] %v1916
        %1981 = vst [vmem:[%s643 + $0x74] sm:$0xf] %v1917
        %1982 = vst [vmem:[%s643 + $0x78] sm:$0xf] %v1918
        %1983 = vst [vmem:[%s643 + $0x7c] sm:$0xf] %v1919
        %v1984 = vld [vmem:[%s570] sm:$0xf]
        %v1985 = vld [vmem:[%s570 + $0x4] sm:$0xf]
        %v1986 = vld [vmem:[%s570 + $0x8] sm:$0xf]
        %v1987 = vld [vmem:[%s570 + $0xc] sm:$0xf]
        %v1988 = vld [vmem:[%s570 + $0x10] sm:$0xf]
        %v1989 = vld [vmem:[%s570 + $0x14] sm:$0xf]
        %v1990 = vld [vmem:[%s570 + $0x18] sm:$0xf]
        %v1991 = vld [vmem:[%s570 + $0x1c] sm:$0xf]
        %v1992 = vld [vmem:[%s570 + $0x20] sm:$0xf]
        %v1993 = vld [vmem:[%s570 + $0x24] sm:$0xf]
        %v1994 = vld [vmem:[%s570 + $0x28] sm:$0xf]
        %v1995 = vld [vmem:[%s570 + $0x2c] sm:$0xf]
        %v1996 = vld [vmem:[%s570 + $0x30] sm:$0xf]
        %v1997 = vld [vmem:[%s570 + $0x34] sm:$0xf]
        %v1998 = vld [vmem:[%s570 + $0x38] sm:$0xf]
        %v1999 = vld [vmem:[%s570 + $0x3c] sm:$0xf]
        %v2000 = vld [vmem:[%s570 + $0x40] sm:$0xf]
        %v2001 = vld [vmem:[%s570 + $0x44] sm:$0xf]
        %v2002 = vld [vmem:[%s570 + $0x48] sm:$0xf]
        %v2003 = vld [vmem:[%s570 + $0x4c] sm:$0xf]
        %v2004 = vld [vmem:[%s570 + $0x50] sm:$0xf]
        %v2005 = vld [vmem:[%s570 + $0x54] sm:$0xf]
        %v2006 = vld [vmem:[%s570 + $0x58] sm:$0xf]
        %v2007 = vld [vmem:[%s570 + $0x5c] sm:$0xf]
        %v2008 = vld [vmem:[%s570 + $0x60] sm:$0xf]
        %v2009 = vld [vmem:[%s570 + $0x64] sm:$0xf]
        %v2010 = vld [vmem:[%s570 + $0x68] sm:$0xf]
        %v2011 = vld [vmem:[%s570 + $0x6c] sm:$0xf]
        %v2012 = vld [vmem:[%s570 + $0x70] sm:$0xf]
        %v2013 = vld [vmem:[%s570 + $0x74] sm:$0xf]
        %v2014 = vld [vmem:[%s570 + $0x78] sm:$0xf]
        %v2015 = vld [vmem:[%s570 + $0x7c] sm:$0xf]
        %v2016 = vld [vmem:[#allocation13] sm:$0xf]
        %v2017 = vld [vmem:[#allocation13 + $0x4] sm:$0xf]
        %v2018 = vld [vmem:[#allocation13 + $0x8] sm:$0xf]
        %v2019 = vld [vmem:[#allocation13 + $0xc] sm:$0xf]
        %v2020 = vld [vmem:[#allocation13 + $0x10] sm:$0xf]
        %v2021 = vld [vmem:[#allocation13 + $0x14] sm:$0xf]
        %v2022 = vld [vmem:[#allocation13 + $0x18] sm:$0xf]
        %v2023 = vld [vmem:[#allocation13 + $0x1c] sm:$0xf]
        %v2024 = vld [vmem:[#allocation13 + $0x20] sm:$0xf]
        %v2025 = vld [vmem:[#allocation13 + $0x24] sm:$0xf]
        %v2026 = vld [vmem:[#allocation13 + $0x28] sm:$0xf]
        %v2027 = vld [vmem:[#allocation13 + $0x2c] sm:$0xf]
        %v2028 = vld [vmem:[#allocation13 + $0x30] sm:$0xf]
        %v2029 = vld [vmem:[#allocation13 + $0x34] sm:$0xf]
        %v2030 = vld [vmem:[#allocation13 + $0x38] sm:$0xf]
        %v2031 = vld [vmem:[#allocation13 + $0x3c] sm:$0xf]
        %v2032 = vld [vmem:[%s11] sm:$0x1]
        %v2034 = vlaneseq
        %v2035 = vshrl.u32 %v2034, 7
        %v2036 = vsub.s32 0, %v2035
        %v2037 = vrot.slane %v2032, %v2036
        %v2071 = vunpack.c.l.b16 %v1984
        %v2072 = vunpack.c.l.b16 %v1985
        %v2073 = vunpack.c.l.b16 %v1986
        %v2074 = vunpack.c.l.b16 %v1987
        %v2075 = vunpack.c.l.b16 %v1988
        %v2076 = vunpack.c.l.b16 %v1989
        %v2077 = vunpack.c.l.b16 %v1990
        %v2078 = vunpack.c.l.b16 %v1991
        %v2079 = vunpack.c.l.b16 %v1992
        %v2080 = vunpack.c.l.b16 %v1993
        %v2081 = vunpack.c.l.b16 %v1994
        %v2082 = vunpack.c.l.b16 %v1995
        %v2083 = vunpack.c.l.b16 %v1996
        %v2084 = vunpack.c.l.b16 %v1997
        %v2085 = vunpack.c.l.b16 %v1998
        %v2086 = vunpack.c.l.b16 %v1999
        %v2087 = vunpack.c.l.b16 %v2000
        %v2088 = vunpack.c.l.b16 %v2001
        %v2089 = vunpack.c.l.b16 %v2002
        %v2090 = vunpack.c.l.b16 %v2003
        %v2091 = vunpack.c.l.b16 %v2004
        %v2092 = vunpack.c.l.b16 %v2005
        %v2093 = vunpack.c.l.b16 %v2006
        %v2094 = vunpack.c.l.b16 %v2007
        %v2095 = vunpack.c.l.b16 %v2008
        %v2096 = vunpack.c.l.b16 %v2009
        %v2097 = vunpack.c.l.b16 %v2010
        %v2098 = vunpack.c.l.b16 %v2011
        %v2099 = vunpack.c.l.b16 %v2012
        %v2100 = vunpack.c.l.b16 %v2013
        %v2101 = vunpack.c.l.b16 %v2014
        %v2102 = vunpack.c.l.b16 %v2015
        %v2103 = vpack.c.b16 %v2072, %v2071
        %v2104 = vpack.c.b16 %v2074, %v2073
        %v2105 = vpack.c.b16 %v2076, %v2075
        %v2106 = vpack.c.b16 %v2078, %v2077
        %v2107 = vpack.c.b16 %v2080, %v2079
        %v2108 = vpack.c.b16 %v2082, %v2081
        %v2109 = vpack.c.b16 %v2084, %v2083
        %v2110 = vpack.c.b16 %v2086, %v2085
        %v2111 = vpack.c.b16 %v2088, %v2087
        %v2112 = vpack.c.b16 %v2090, %v2089
        %v2113 = vpack.c.b16 %v2092, %v2091
        %v2114 = vpack.c.b16 %v2094, %v2093
        %v2115 = vpack.c.b16 %v2096, %v2095
        %v2116 = vpack.c.b16 %v2098, %v2097
        %v2117 = vpack.c.b16 %v2100, %v2099
        %v2118 = vpack.c.b16 %v2102, %v2101
        %v2151 = vunpack.c.l.b16 %v2016
        %v2152 = vunpack.c.l.b16 %v2017
        %v2153 = vunpack.c.l.b16 %v2018
        %v2154 = vunpack.c.l.b16 %v2019
        %v2155 = vunpack.c.l.b16 %v2020
        %v2156 = vunpack.c.l.b16 %v2021
        %v2157 = vunpack.c.l.b16 %v2022
        %v2158 = vunpack.c.l.b16 %v2023
        %v2159 = vunpack.c.l.b16 %v2024
        %v2160 = vunpack.c.l.b16 %v2025
        %v2161 = vunpack.c.l.b16 %v2026
        %v2162 = vunpack.c.l.b16 %v2027
        %v2163 = vunpack.c.l.b16 %v2028
        %v2164 = vunpack.c.l.b16 %v2029
        %v2165 = vunpack.c.l.b16 %v2030
        %v2166 = vunpack.c.l.b16 %v2031
        %v2167 = vpack.c.b16 %v2152, %v2151
        %v2168 = vpack.c.b16 %v2154, %v2153
        %v2169 = vpack.c.b16 %v2156, %v2155
        %v2170 = vpack.c.b16 %v2158, %v2157
        %v2171 = vpack.c.b16 %v2160, %v2159
        %v2172 = vpack.c.b16 %v2162, %v2161
        %v2173 = vpack.c.b16 %v2164, %v2163
        %v2174 = vpack.c.b16 %v2166, %v2165
        %2183 = vmatprep.subr.bf16.mxu0 0
        %2184 = vmatpush1.bf16.msra.mxu0 %v2167
        %2185 = vmatprep.subr.bf16.mxu0 0
        %2186 = vmatpush1.bf16.msra.mxu0 %v2168
        %2187 = vmatprep.subr.bf16.mxu0 0
        %2188 = vmatpush1.bf16.msra.mxu0 %v2169
        %2189 = vmatprep.subr.bf16.mxu0 0
        %2190 = vmatpush1.bf16.msra.mxu0 %v2170
        %2191 = vmatprep.subr.bf16.mxu0 0
        %2192 = vmatpush1.bf16.msra.mxu0 %v2171
        %2193 = vmatprep.subr.bf16.mxu0 0
        %2194 = vmatpush1.bf16.msra.mxu0 %v2172
        %2195 = vmatprep.subr.bf16.mxu0 0
        %2196 = vmatpush1.bf16.msra.mxu0 %v2173
        %2197 = vmatprep.subr.bf16.mxu0 0
        %2198 = vmatpush1.bf16.msra.mxu0 %v2174
        %2199 = vmatprep.subr.bf16.mxu0 0
        %2200 = vmatpush1.bf16.msra.mxu0 0
        %2201 = vmatprep.subr.bf16.mxu0 0
        %2202 = vmatpush1.bf16.msra.mxu0 0
        %2203 = vmatprep.subr.bf16.mxu0 0
        %2204 = vmatpush1.bf16.msra.mxu0 0
        %2205 = vmatprep.subr.bf16.mxu0 0
        %2206 = vmatpush1.bf16.msra.mxu0 0
        %2207 = vmatprep.subr.bf16.mxu0 0
        %2208 = vmatpush1.bf16.msra.mxu0 0
        %2209 = vmatprep.subr.bf16.mxu0 0
        %2210 = vmatpush1.bf16.msra.mxu0 0
        %2211 = vmatprep.subr.bf16.mxu0 0
        %2212 = vmatpush1.bf16.msra.mxu0 0
        %2213 = vmatprep.subr.bf16.mxu0 0
        %2214 = vmatpush1.bf16.msra.mxu0 0
        %2215 = vmatprep.mubr.bf16.mxu0 0
        %2216 = vmatmul.mubr.bf16.gmra.mrb[0].mxu0 %v2103
        %v2217 = vpop.f32.mrb[0].mxu0
        %v2218 = vadd.f32 %v2037, %v2217
        %v2219 = vpop.f32.mrb[0].mxu0
        %v2220 = vpop.f32.mrb[0].mxu0
        %v2221 = vadd.f32 %v2037, %v2220
        %v2222 = vpop.f32.mrb[0].mxu0
        %2223 = vmatprep.mubr.bf16.mxu0 0
        %2224 = vmatmul.mubr.bf16.gmra.mrb[0].mxu0 %v2104
        %v2225 = vpop.f32.mrb[0].mxu0
        %v2226 = vadd.f32 %v2037, %v2225
        %v2227 = vpop.f32.mrb[0].mxu0
        %v2228 = vpop.f32.mrb[0].mxu0
        %v2229 = vadd.f32 %v2037, %v2228
        %v2230 = vpop.f32.mrb[0].mxu0
        %2231 = vmatprep.mubr.bf16.mxu0 0
        %2232 = vmatmul.mubr.bf16.gmra.mrb[0].mxu0 %v2105
        %v2233 = vpop.f32.mrb[0].mxu0
        %v2234 = vadd.f32 %v2037, %v2233
        %v2235 = vpop.f32.mrb[0].mxu0
        %v2236 = vpop.f32.mrb[0].mxu0
        %v2237 = vadd.f32 %v2037, %v2236
        %v2238 = vpop.f32.mrb[0].mxu0
        %2239 = vmatprep.mubr.bf16.mxu0 0
        %2240 = vmatmul.mubr.bf16.gmra.mrb[0].mxu0 %v2106
        %v2241 = vpop.f32.mrb[0].mxu0
        %v2242 = vadd.f32 %v2037, %v2241
        %v2243 = vpop.f32.mrb[0].mxu0
        %v2244 = vpop.f32.mrb[0].mxu0
        %v2245 = vadd.f32 %v2037, %v2244
        %v2246 = vpop.f32.mrb[0].mxu0
        %2247 = vmatprep.mubr.bf16.mxu0 0
        %2248 = vmatmul.mubr.bf16.gmra.mrb[0].mxu0 %v2107
        %v2249 = vpop.f32.mrb[0].mxu0
        %v2250 = vadd.f32 %v2037, %v2249
        %v2251 = vpop.f32.mrb[0].mxu0
        %v2252 = vpop.f32.mrb[0].mxu0
        %v2253 = vadd.f32 %v2037, %v2252
        %v2254 = vpop.f32.mrb[0].mxu0
        %2255 = vmatprep.mubr.bf16.mxu0 0
        %2256 = vmatmul.mubr.bf16.gmra.mrb[0].mxu0 %v2108
        %v2257 = vpop.f32.mrb[0].mxu0
        %v2258 = vadd.f32 %v2037, %v2257
        %v2259 = vpop.f32.mrb[0].mxu0
        %v2260 = vpop.f32.mrb[0].mxu0
        %v2261 = vadd.f32 %v2037, %v2260
        %v2262 = vpop.f32.mrb[0].mxu0
        %2263 = vmatprep.mubr.bf16.mxu0 0
        %2264 = vmatmul.mubr.bf16.gmra.mrb[0].mxu0 %v2109
        %v2265 = vpop.f32.mrb[0].mxu0
        %v2266 = vadd.f32 %v2037, %v2265
        %v2267 = vpop.f32.mrb[0].mxu0
        %v2268 = vpop.f32.mrb[0].mxu0
        %v2269 = vadd.f32 %v2037, %v2268
        %v2270 = vpop.f32.mrb[0].mxu0
        %2271 = vmatprep.mubr.bf16.mxu0 0
        %2272 = vmatmul.mubr.bf16.gmra.mrb[0].mxu0 %v2110
        %v2273 = vpop.f32.mrb[0].mxu0
        %v2274 = vadd.f32 %v2037, %v2273
        %v2275 = vpop.f32.mrb[0].mxu0
        %v2276 = vpop.f32.mrb[0].mxu0
        %v2277 = vadd.f32 %v2037, %v2276
        %v2278 = vpop.f32.mrb[0].mxu0
        %2279 = vmatprep.mubr.bf16.mxu0 0
        %2280 = vmatmul.mubr.bf16.gmra.mrb[0].mxu0 %v2111
        %v2281 = vpop.f32.mrb[0].mxu0
        %v2282 = vadd.f32 %v2037, %v2281
        %v2283 = vpop.f32.mrb[0].mxu0
        %v2284 = vpop.f32.mrb[0].mxu0
        %v2285 = vadd.f32 %v2037, %v2284
        %v2286 = vpop.f32.mrb[0].mxu0
        %2287 = vmatprep.mubr.bf16.mxu0 0
        %2288 = vmatmul.mubr.bf16.gmra.mrb[0].mxu0 %v2112
        %v2289 = vpop.f32.mrb[0].mxu0
        %v2290 = vadd.f32 %v2037, %v2289
        %v2291 = vpop.f32.mrb[0].mxu0
        %v2292 = vpop.f32.mrb[0].mxu0
        %v2293 = vadd.f32 %v2037, %v2292
        %v2294 = vpop.f32.mrb[0].mxu0
        %2295 = vmatprep.mubr.bf16.mxu0 0
        %2296 = vmatmul.mubr.bf16.gmra.mrb[0].mxu0 %v2113
        %v2297 = vpop.f32.mrb[0].mxu0
        %v2298 = vadd.f32 %v2037, %v2297
        %v2299 = vpop.f32.mrb[0].mxu0
        %v2300 = vpop.f32.mrb[0].mxu0
        %v2301 = vadd.f32 %v2037, %v2300
        %v2302 = vpop.f32.mrb[0].mxu0
        %2303 = vmatprep.mubr.bf16.mxu0 0
        %2304 = vmatmul.mubr.bf16.gmra.mrb[0].mxu0 %v2114
        %v2305 = vpop.f32.mrb[0].mxu0
        %v2306 = vadd.f32 %v2037, %v2305
        %v2307 = vpop.f32.mrb[0].mxu0
        %v2308 = vpop.f32.mrb[0].mxu0
        %v2309 = vadd.f32 %v2037, %v2308
        %v2310 = vpop.f32.mrb[0].mxu0
        %2311 = vmatprep.mubr.bf16.mxu0 0
        %2312 = vmatmul.mubr.bf16.gmra.mrb[0].mxu0 %v2115
        %v2313 = vpop.f32.mrb[0].mxu0
        %v2314 = vadd.f32 %v2037, %v2313
        %v2315 = vpop.f32.mrb[0].mxu0
        %v2316 = vpop.f32.mrb[0].mxu0
        %v2317 = vadd.f32 %v2037, %v2316
        %v2318 = vpop.f32.mrb[0].mxu0
        %2319 = vmatprep.mubr.bf16.mxu0 0
        %2320 = vmatmul.mubr.bf16.gmra.mrb[0].mxu0 %v2116
        %v2321 = vpop.f32.mrb[0].mxu0
        %v2322 = vadd.f32 %v2037, %v2321
        %v2323 = vpop.f32.mrb[0].mxu0
        %v2324 = vpop.f32.mrb[0].mxu0
        %v2325 = vadd.f32 %v2037, %v2324
        %v2326 = vpop.f32.mrb[0].mxu0
        %2327 = vmatprep.mubr.bf16.mxu0 0
        %2328 = vmatmul.mubr.bf16.gmra.mrb[0].mxu0 %v2117
        %v2329 = vpop.f32.mrb[0].mxu0
        %v2330 = vadd.f32 %v2037, %v2329
        %v2331 = vpop.f32.mrb[0].mxu0
        %v2332 = vpop.f32.mrb[0].mxu0
        %v2333 = vadd.f32 %v2037, %v2332
        %v2334 = vpop.f32.mrb[0].mxu0
        %2335 = vmatprep.mubr.bf16.mxu0 0
        %2336 = vmatmul.mubr.bf16.gmra.mrb[0].mxu0 %v2118
        %v2337 = vpop.f32.mrb[0].mxu0
        %v2338 = vadd.f32 %v2037, %v2337
        %v2339 = vpop.f32.mrb[0].mxu0
        %v2340 = vpop.f32.mrb[0].mxu0
        %v2341 = vadd.f32 %v2037, %v2340
        %v2342 = vpop.f32.mrb[0].mxu0
        %2343 = vdwg.mxu0
        %v2344 = vmax.f32 %v2218, 0.0
        %v2345 = vmax.f32 %v2221, 0.0
        %v2346 = vmax.f32 %v2226, 0.0
        %v2347 = vmax.f32 %v2229, 0.0
        %v2348 = vmax.f32 %v2234, 0.0
        %v2349 = vmax.f32 %v2237, 0.0
        %v2350 = vmax.f32 %v2242, 0.0
        %v2351 = vmax.f32 %v2245, 0.0
        %v2352 = vmax.f32 %v2250, 0.0
        %v2353 = vmax.f32 %v2253, 0.0
        %v2354 = vmax.f32 %v2258, 0.0
        %v2355 = vmax.f32 %v2261, 0.0
        %v2356 = vmax.f32 %v2266, 0.0
        %v2357 = vmax.f32 %v2269, 0.0
        %v2358 = vmax.f32 %v2274, 0.0
        %v2359 = vmax.f32 %v2277, 0.0
        %v2360 = vmax.f32 %v2282, 0.0
        %v2361 = vmax.f32 %v2285, 0.0
        %v2362 = vmax.f32 %v2290, 0.0
        %v2363 = vmax.f32 %v2293, 0.0
        %v2364 = vmax.f32 %v2298, 0.0
        %v2365 = vmax.f32 %v2301, 0.0
        %v2366 = vmax.f32 %v2306, 0.0
        %v2367 = vmax.f32 %v2309, 0.0
        %v2368 = vmax.f32 %v2314, 0.0
        %v2369 = vmax.f32 %v2317, 0.0
        %v2370 = vmax.f32 %v2322, 0.0
        %v2371 = vmax.f32 %v2325, 0.0
        %v2372 = vmax.f32 %v2330, 0.0
        %v2373 = vmax.f32 %v2333, 0.0
        %v2374 = vmax.f32 %v2338, 0.0
        %v2375 = vmax.f32 %v2341, 0.0
        %v2376 = vpack.c.bf16 %v2345, %v2344
        %v2377 = vpack.c.bf16 %v2347, %v2346
        %v2378 = vpack.c.bf16 %v2349, %v2348
        %v2379 = vpack.c.bf16 %v2351, %v2350
        %v2380 = vpack.c.bf16 %v2353, %v2352
        %v2381 = vpack.c.bf16 %v2355, %v2354
        %v2382 = vpack.c.bf16 %v2357, %v2356
        %v2383 = vpack.c.bf16 %v2359, %v2358
        %v2384 = vpack.c.bf16 %v2361, %v2360
        %v2385 = vpack.c.bf16 %v2363, %v2362
        %v2386 = vpack.c.bf16 %v2365, %v2364
        %v2387 = vpack.c.bf16 %v2367, %v2366
        %v2388 = vpack.c.bf16 %v2369, %v2368
        %v2389 = vpack.c.bf16 %v2371, %v2370
        %v2390 = vpack.c.bf16 %v2373, %v2372
        %v2391 = vpack.c.bf16 %v2375, %v2374
        %v2392 = vld [vmem:[#allocation14] sm:$0xf]
        %v2393 = vld [vmem:[#allocation14 + $0x4] sm:$0xf]
        %v2394 = vld [vmem:[#allocation14 + $0x8] sm:$0xf]
        %v2395 = vld [vmem:[#allocation14 + $0xc] sm:$0xf]
        %v2396 = vld [vmem:[#allocation14 + $0x10] sm:$0xf]
        %v2397 = vld [vmem:[#allocation14 + $0x14] sm:$0xf]
        %v2398 = vld [vmem:[#allocation14 + $0x18] sm:$0xf]
        %v2399 = vld [vmem:[#allocation14 + $0x1c] sm:$0xf]
        %v2400 = vld [vmem:[#allocation14 + $0x20] sm:$0xf]
        %v2401 = vld [vmem:[#allocation14 + $0x24] sm:$0xf]
        %v2402 = vld [vmem:[#allocation14 + $0x28] sm:$0xf]
        %v2403 = vld [vmem:[#allocation14 + $0x2c] sm:$0xf]
        %v2404 = vld [vmem:[#allocation14 + $0x30] sm:$0xf]
        %v2405 = vld [vmem:[#allocation14 + $0x34] sm:$0xf]
        %v2406 = vld [vmem:[#allocation14 + $0x38] sm:$0xf]
        %v2407 = vld [vmem:[#allocation14 + $0x3c] sm:$0xf]
        %v2408 = vld [vmem:[%s13] sm:$0x1]
        %v2410 = vlaneseq
        %v2411 = vshrl.u32 %v2410, 7
        %v2412 = vsub.s32 0, %v2411
        %v2413 = vrot.slane %v2408, %v2412
        %v2431 = vunpack.c.l.b16 %v2392
        %v2432 = vunpack.c.l.b16 %v2393
        %v2433 = vunpack.c.l.b16 %v2394
        %v2434 = vunpack.c.l.b16 %v2395
        %v2435 = vunpack.c.l.b16 %v2396
        %v2436 = vunpack.c.l.b16 %v2397
        %v2437 = vunpack.c.l.b16 %v2398
        %v2438 = vunpack.c.l.b16 %v2399
        %v2439 = vunpack.c.l.b16 %v2400
        %v2440 = vunpack.c.l.b16 %v2401
        %v2441 = vunpack.c.l.b16 %v2402
        %v2442 = vunpack.c.l.b16 %v2403
        %v2443 = vunpack.c.l.b16 %v2404
        %v2444 = vunpack.c.l.b16 %v2405
        %v2445 = vunpack.c.l.b16 %v2406
        %v2446 = vunpack.c.l.b16 %v2407
        %v2447 = vpack.c.b16 %v2432, %v2431
        %v2448 = vpack.c.b16 %v2434, %v2433
        %v2449 = vpack.c.b16 %v2436, %v2435
        %v2450 = vpack.c.b16 %v2438, %v2437
        %v2451 = vpack.c.b16 %v2440, %v2439
        %v2452 = vpack.c.b16 %v2442, %v2441
        %v2453 = vpack.c.b16 %v2444, %v2443
        %v2454 = vpack.c.b16 %v2446, %v2445
        %2463 = vmatprep.subr.bf16.mxu0 0
        %2464 = vmatpush1.bf16.msra.mxu0 %v2447
        %2465 = vmatprep.subr.bf16.mxu0 0
        %2466 = vmatpush1.bf16.msra.mxu0 %v2448
        %2467 = vmatprep.subr.bf16.mxu0 0
        %2468 = vmatpush1.bf16.msra.mxu0 %v2449
        %2469 = vmatprep.subr.bf16.mxu0 0
        %2470 = vmatpush1.bf16.msra.mxu0 %v2450
        %2471 = vmatprep.subr.bf16.mxu0 0
        %2472 = vmatpush1.bf16.msra.mxu0 %v2451
        %2473 = vmatprep.subr.bf16.mxu0 0
        %2474 = vmatpush1.bf16.msra.mxu0 %v2452
        %2475 = vmatprep.subr.bf16.mxu0 0
        %2476 = vmatpush1.bf16.msra.mxu0 %v2453
        %2477 = vmatprep.subr.bf16.mxu0 0
        %2478 = vmatpush1.bf16.msra.mxu0 %v2454
        %2479 = vmatprep.subr.bf16.mxu0 0
        %2480 = vmatpush1.bf16.msra.mxu0 0
        %2481 = vmatprep.subr.bf16.mxu0 0
        %2482 = vmatpush1.bf16.msra.mxu0 0
        %2483 = vmatprep.subr.bf16.mxu0 0
        %2484 = vmatpush1.bf16.msra.mxu0 0
        %2485 = vmatprep.subr.bf16.mxu0 0
        %2486 = vmatpush1.bf16.msra.mxu0 0
        %2487 = vmatprep.subr.bf16.mxu0 0
        %2488 = vmatpush1.bf16.msra.mxu0 0
        %2489 = vmatprep.subr.bf16.mxu0 0
        %2490 = vmatpush1.bf16.msra.mxu0 0
        %2491 = vmatprep.subr.bf16.mxu0 0
        %2492 = vmatpush1.bf16.msra.mxu0 0
        %2493 = vmatprep.subr.bf16.mxu0 0
        %2494 = vmatpush1.bf16.msra.mxu0 0
        %2495 = vmatprep.mubr.bf16.mxu0 0
        %2496 = vmatmul.mubr.bf16.gmra.mrb[0].mxu0 %v2376
        %v2497 = vpop.f32.mrb[0].mxu0
        %v2498 = vadd.f32 %v2413, %v2497
        %v2499 = vpop.f32.mrb[0].mxu0
        %v2500 = vpop.f32.mrb[0].mxu0
        %v2501 = vadd.f32 %v2413, %v2500
        %v2502 = vpop.f32.mrb[0].mxu0
        %2503 = vmatprep.mubr.bf16.mxu0 0
        %2504 = vmatmul.mubr.bf16.gmra.mrb[0].mxu0 %v2377
        %v2505 = vpop.f32.mrb[0].mxu0
        %v2506 = vadd.f32 %v2413, %v2505
        %v2507 = vpop.f32.mrb[0].mxu0
        %v2508 = vpop.f32.mrb[0].mxu0
        %v2509 = vadd.f32 %v2413, %v2508
        %v2510 = vpop.f32.mrb[0].mxu0
        %2511 = vmatprep.mubr.bf16.mxu0 0
        %2512 = vmatmul.mubr.bf16.gmra.mrb[0].mxu0 %v2378
        %v2513 = vpop.f32.mrb[0].mxu0
        %v2514 = vadd.f32 %v2413, %v2513
        %v2515 = vpop.f32.mrb[0].mxu0
        %v2516 = vpop.f32.mrb[0].mxu0
        %v2517 = vadd.f32 %v2413, %v2516
        %v2518 = vpop.f32.mrb[0].mxu0
        %2519 = vmatprep.mubr.bf16.mxu0 0
        %2520 = vmatmul.mubr.bf16.gmra.mrb[0].mxu0 %v2379
        %v2521 = vpop.f32.mrb[0].mxu0
        %v2522 = vadd.f32 %v2413, %v2521
        %v2523 = vpop.f32.mrb[0].mxu0
        %v2524 = vpop.f32.mrb[0].mxu0
        %v2525 = vadd.f32 %v2413, %v2524
        %v2526 = vpop.f32.mrb[0].mxu0
        %2527 = vmatprep.mubr.bf16.mxu0 0
        %2528 = vmatmul.mubr.bf16.gmra.mrb[0].mxu0 %v2380
        %v2529 = vpop.f32.mrb[0].mxu0
        %v2530 = vadd.f32 %v2413, %v2529
        %v2531 = vpop.f32.mrb[0].mxu0
        %v2532 = vpop.f32.mrb[0].mxu0
        %v2533 = vadd.f32 %v2413, %v2532
        %v2534 = vpop.f32.mrb[0].mxu0
        %2535 = vmatprep.mubr.bf16.mxu0 0
        %2536 = vmatmul.mubr.bf16.gmra.mrb[0].mxu0 %v2381
        %v2537 = vpop.f32.mrb[0].mxu0
        %v2538 = vadd.f32 %v2413, %v2537
        %v2539 = vpop.f32.mrb[0].mxu0
        %v2540 = vpop.f32.mrb[0].mxu0
        %v2541 = vadd.f32 %v2413, %v2540
        %v2542 = vpop.f32.mrb[0].mxu0
        %2543 = vmatprep.mubr.bf16.mxu0 0
        %2544 = vmatmul.mubr.bf16.gmra.mrb[0].mxu0 %v2382
        %v2545 = vpop.f32.mrb[0].mxu0
        %v2546 = vadd.f32 %v2413, %v2545
        %v2547 = vpop.f32.mrb[0].mxu0
        %v2548 = vpop.f32.mrb[0].mxu0
        %v2549 = vadd.f32 %v2413, %v2548
        %v2550 = vpop.f32.mrb[0].mxu0
        %2551 = vmatprep.mubr.bf16.mxu0 0
        %2552 = vmatmul.mubr.bf16.gmra.mrb[0].mxu0 %v2383
        %v2553 = vpop.f32.mrb[0].mxu0
        %v2554 = vadd.f32 %v2413, %v2553
        %v2555 = vpop.f32.mrb[0].mxu0
        %v2556 = vpop.f32.mrb[0].mxu0
        %v2557 = vadd.f32 %v2413, %v2556
        %v2558 = vpop.f32.mrb[0].mxu0
        %2559 = vmatprep.mubr.bf16.mxu0 0
        %2560 = vmatmul.mubr.bf16.gmra.mrb[0].mxu0 %v2384
        %v2561 = vpop.f32.mrb[0].mxu0
        %v2562 = vadd.f32 %v2413, %v2561
        %v2563 = vpop.f32.mrb[0].mxu0
        %v2564 = vpop.f32.mrb[0].mxu0
        %v2565 = vadd.f32 %v2413, %v2564
        %v2566 = vpop.f32.mrb[0].mxu0
        %2567 = vmatprep.mubr.bf16.mxu0 0
        %2568 = vmatmul.mubr.bf16.gmra.mrb[0].mxu0 %v2385
        %v2569 = vpop.f32.mrb[0].mxu0
        %v2570 = vadd.f32 %v2413, %v2569
        %v2571 = vpop.f32.mrb[0].mxu0
        %v2572 = vpop.f32.mrb[0].mxu0
        %v2573 = vadd.f32 %v2413, %v2572
        %v2574 = vpop.f32.mrb[0].mxu0
        %2575 = vmatprep.mubr.bf16.mxu0 0
        %2576 = vmatmul.mubr.bf16.gmra.mrb[0].mxu0 %v2386
        %v2577 = vpop.f32.mrb[0].mxu0
        %v2578 = vadd.f32 %v2413, %v2577
        %v2579 = vpop.f32.mrb[0].mxu0
        %v2580 = vpop.f32.mrb[0].mxu0
        %v2581 = vadd.f32 %v2413, %v2580
        %v2582 = vpop.f32.mrb[0].mxu0
        %2583 = vmatprep.mubr.bf16.mxu0 0
        %2584 = vmatmul.mubr.bf16.gmra.mrb[0].mxu0 %v2387
        %v2585 = vpop.f32.mrb[0].mxu0
        %v2586 = vadd.f32 %v2413, %v2585
        %v2587 = vpop.f32.mrb[0].mxu0
        %v2588 = vpop.f32.mrb[0].mxu0
        %v2589 = vadd.f32 %v2413, %v2588
        %v2590 = vpop.f32.mrb[0].mxu0
        %2591 = vmatprep.mubr.bf16.mxu0 0
        %2592 = vmatmul.mubr.bf16.gmra.mrb[0].mxu0 %v2388
        %v2593 = vpop.f32.mrb[0].mxu0
        %v2594 = vadd.f32 %v2413, %v2593
        %v2595 = vpop.f32.mrb[0].mxu0
        %v2596 = vpop.f32.mrb[0].mxu0
        %v2597 = vadd.f32 %v2413, %v2596
        %v2598 = vpop.f32.mrb[0].mxu0
        %2599 = vmatprep.mubr.bf16.mxu0 0
        %2600 = vmatmul.mubr.bf16.gmra.mrb[0].mxu0 %v2389
        %v2601 = vpop.f32.mrb[0].mxu0
        %v2602 = vadd.f32 %v2413, %v2601
        %v2603 = vpop.f32.mrb[0].mxu0
        %v2604 = vpop.f32.mrb[0].mxu0
        %v2605 = vadd.f32 %v2413, %v2604
        %v2606 = vpop.f32.mrb[0].mxu0
        %2607 = vmatprep.mubr.bf16.mxu0 0
        %2608 = vmatmul.mubr.bf16.gmra.mrb[0].mxu0 %v2390
        %v2609 = vpop.f32.mrb[0].mxu0
        %v2610 = vadd.f32 %v2413, %v2609
        %v2611 = vpop.f32.mrb[0].mxu0
        %v2612 = vpop.f32.mrb[0].mxu0
        %v2613 = vadd.f32 %v2413, %v2612
        %v2614 = vpop.f32.mrb[0].mxu0
        %2615 = vmatprep.mubr.bf16.mxu0 0
        %2616 = vmatmul.mubr.bf16.gmra.mrb[0].mxu0 %v2391
        %v2617 = vpop.f32.mrb[0].mxu0
        %v2618 = vadd.f32 %v2413, %v2617
        %v2619 = vpop.f32.mrb[0].mxu0
        %v2620 = vpop.f32.mrb[0].mxu0
        %v2621 = vadd.f32 %v2413, %v2620
        %v2622 = vpop.f32.mrb[0].mxu0
        %2623 = vdwg.mxu0
        %v2624 = vpack.c.bf16 %v2501, %v2498
        %v2625 = vpack.c.bf16 %v2509, %v2506
        %v2626 = vpack.c.bf16 %v2517, %v2514
        %v2627 = vpack.c.bf16 %v2525, %v2522
        %v2628 = vpack.c.bf16 %v2533, %v2530
        %v2629 = vpack.c.bf16 %v2541, %v2538
        %v2630 = vpack.c.bf16 %v2549, %v2546
        %v2631 = vpack.c.bf16 %v2557, %v2554
        %v2632 = vpack.c.bf16 %v2565, %v2562
        %v2633 = vpack.c.bf16 %v2573, %v2570
        %v2634 = vpack.c.bf16 %v2581, %v2578
        %v2635 = vpack.c.bf16 %v2589, %v2586
        %v2636 = vpack.c.bf16 %v2597, %v2594
        %v2637 = vpack.c.bf16 %v2605, %v2602
        %v2638 = vpack.c.bf16 %v2613, %v2610
        %v2639 = vpack.c.bf16 %v2621, %v2618
        %v2656 = vunpack.c.l.b16 %v2624
        %v2657 = vunpack.c.h.b16 %v2624
        %v2658 = vunpack.c.l.b16 %v2625
        %v2659 = vunpack.c.h.b16 %v2625
        %v2660 = vunpack.c.l.b16 %v2626
        %v2661 = vunpack.c.h.b16 %v2626
        %v2662 = vunpack.c.l.b16 %v2627
        %v2663 = vunpack.c.h.b16 %v2627
        %v2664 = vunpack.c.l.b16 %v2628
        %v2665 = vunpack.c.h.b16 %v2628
        %v2666 = vunpack.c.l.b16 %v2629
        %v2667 = vunpack.c.h.b16 %v2629
        %v2668 = vunpack.c.l.b16 %v2630
        %v2669 = vunpack.c.h.b16 %v2630
        %v2670 = vunpack.c.l.b16 %v2631
        %v2671 = vunpack.c.h.b16 %v2631
        %v2672 = vunpack.c.l.b16 %v2632
        %v2673 = vunpack.c.h.b16 %v2632
        %v2674 = vunpack.c.l.b16 %v2633
        %v2675 = vunpack.c.h.b16 %v2633
        %v2676 = vunpack.c.l.b16 %v2634
        %v2677 = vunpack.c.h.b16 %v2634
        %v2678 = vunpack.c.l.b16 %v2635
        %v2679 = vunpack.c.h.b16 %v2635
        %v2680 = vunpack.c.l.b16 %v2636
        %v2681 = vunpack.c.h.b16 %v2636
        %v2682 = vunpack.c.l.b16 %v2637
        %v2683 = vunpack.c.h.b16 %v2637
        %v2684 = vunpack.c.l.b16 %v2638
        %v2685 = vunpack.c.h.b16 %v2638
        %v2686 = vunpack.c.l.b16 %v2639
        %v2687 = vunpack.c.h.b16 %v2639
        %v2688 = vpack.c.b16 %v2656, %v2656
        %v2689 = vpack.c.b16 %v2657, %v2657
        %v2690 = vpack.c.b16 %v2658, %v2658
        %v2691 = vpack.c.b16 %v2659, %v2659
        %v2692 = vpack.c.b16 %v2660, %v2660
        %v2693 = vpack.c.b16 %v2661, %v2661
        %v2694 = vpack.c.b16 %v2662, %v2662
        %v2695 = vpack.c.b16 %v2663, %v2663
        %v2696 = vpack.c.b16 %v2664, %v2664
        %v2697 = vpack.c.b16 %v2665, %v2665
        %v2698 = vpack.c.b16 %v2666, %v2666
        %v2699 = vpack.c.b16 %v2667, %v2667
        %v2700 = vpack.c.b16 %v2668, %v2668
        %v2701 = vpack.c.b16 %v2669, %v2669
        %v2702 = vpack.c.b16 %v2670, %v2670
        %v2703 = vpack.c.b16 %v2671, %v2671
        %v2704 = vpack.c.b16 %v2672, %v2672
        %v2705 = vpack.c.b16 %v2673, %v2673
        %v2706 = vpack.c.b16 %v2674, %v2674
        %v2707 = vpack.c.b16 %v2675, %v2675
        %v2708 = vpack.c.b16 %v2676, %v2676
        %v2709 = vpack.c.b16 %v2677, %v2677
        %v2710 = vpack.c.b16 %v2678, %v2678
        %v2711 = vpack.c.b16 %v2679, %v2679
        %v2712 = vpack.c.b16 %v2680, %v2680
        %v2713 = vpack.c.b16 %v2681, %v2681
        %v2714 = vpack.c.b16 %v2682, %v2682
        %v2715 = vpack.c.b16 %v2683, %v2683
        %v2716 = vpack.c.b16 %v2684, %v2684
        %v2717 = vpack.c.b16 %v2685, %v2685
        %v2718 = vpack.c.b16 %v2686, %v2686
        %v2719 = vpack.c.b16 %v2687, %v2687
        %2752 = vst [vmem:[%s650] sm:$0xf] %v2688
        %2753 = vst [vmem:[%s650 + $0x4] sm:$0xf] %v2689
        %2754 = vst [vmem:[%s650 + $0x8] sm:$0xf] %v2690
        %2755 = vst [vmem:[%s650 + $0xc] sm:$0xf] %v2691
        %2756 = vst [vmem:[%s650 + $0x10] sm:$0xf] %v2692
        %2757 = vst [vmem:[%s650 + $0x14] sm:$0xf] %v2693
        %2758 = vst [vmem:[%s650 + $0x18] sm:$0xf] %v2694
        %2759 = vst [vmem:[%s650 + $0x1c] sm:$0xf] %v2695
        %2760 = vst [vmem:[%s650 + $0x20] sm:$0xf] %v2696
        %2761 = vst [vmem:[%s650 + $0x24] sm:$0xf] %v2697
        %2762 = vst [vmem:[%s650 + $0x28] sm:$0xf] %v2698
        %2763 = vst [vmem:[%s650 + $0x2c] sm:$0xf] %v2699
        %2764 = vst [vmem:[%s650 + $0x30] sm:$0xf] %v2700
        %2765 = vst [vmem:[%s650 + $0x34] sm:$0xf] %v2701
        %2766 = vst [vmem:[%s650 + $0x38] sm:$0xf] %v2702
        %2767 = vst [vmem:[%s650 + $0x3c] sm:$0xf] %v2703
        %2768 = vst [vmem:[%s650 + $0x40] sm:$0xf] %v2704
        %2769 = vst [vmem:[%s650 + $0x44] sm:$0xf] %v2705
        %2770 = vst [vmem:[%s650 + $0x48] sm:$0xf] %v2706
        %2771 = vst [vmem:[%s650 + $0x4c] sm:$0xf] %v2707
        %2772 = vst [vmem:[%s650 + $0x50] sm:$0xf] %v2708
        %2773 = vst [vmem:[%s650 + $0x54] sm:$0xf] %v2709
        %2774 = vst [vmem:[%s650 + $0x58] sm:$0xf] %v2710
        %2775 = vst [vmem:[%s650 + $0x5c] sm:$0xf] %v2711
        %2776 = vst [vmem:[%s650 + $0x60] sm:$0xf] %v2712
        %2777 = vst [vmem:[%s650 + $0x64] sm:$0xf] %v2713
        %2778 = vst [vmem:[%s650 + $0x68] sm:$0xf] %v2714
        %2779 = vst [vmem:[%s650 + $0x6c] sm:$0xf] %v2715
        %2780 = vst [vmem:[%s650 + $0x70] sm:$0xf] %v2716
        %2781 = vst [vmem:[%s650 + $0x74] sm:$0xf] %v2717
        %2782 = vst [vmem:[%s650 + $0x78] sm:$0xf] %v2718
        %2783 = vst [vmem:[%s650 + $0x7c] sm:$0xf] %v2719
        %s2784 = sand.u32 %s354, 1
        %s2785 = scalar_lea.sflag [#allocation4], %s2784
        %s2786 = sand.u32 %s354, 1
        %s2787 = smul.addr %s2786, 128
        %s2788 = scalar_lea.vmem [#allocation16], %s2787
        %s2789 = sand.u32 %s380, 1
        %s2790 = scalar_lea.sflag [#allocation18], %s2789
        %s2791 = sand.u32 %s380, 1
        %s2792 = smul.addr %s2791, 128
        %s2793 = scalar_lea.vmem [#allocation17], %s2792
        // Predicated region
        $region109: #{tpu_custom_call.1} parent=75 // pred_check
          %p2794 = pneg %p364
        $region110: #{tpu_custom_call.1} parent=75 // pred_check_branch
          %2796 = sbr.rel (%p2794) target = $region112
        $region111: #{tpu_custom_call.1} parent=75 // pred_region
          %s2797 = smul.u32 32, %s42
          %s2799 = ssub.s32 2048, 2048
          %2800 = vsyncadd %s2785, %s2799
          %s2801 = smul.addr %s2797, 64
          %s2802 = scalar_lea.hbm %s14, %s2801
          %s2803 = sshll.u32 %s2788, 4
          %s2804 = int_to_ptr.vmem [resolvable:$true] %s2803
          %2809 = dma.vmem_to_hbm [thread:$0]  %s2804, 2048, %s2802, %s2785, 64, 64, 4
        $region112: #{tpu_custom_call.1} parent=75 // pred_fallthru
          _
        // Predicated region
        $region113: #{tpu_custom_call.1} parent=75 // pred_check
          %p2810 = pneg %p390
        $region114: #{tpu_custom_call.1} parent=75 // pred_check_branch
          %2812 = sbr.rel (%p2810) target = $region116
        $region115: #{tpu_custom_call.1} parent=75 // pred_region
          %s2813 = smul.u32 32, %s42
          %s2815 = ssub.s32 2048, 2048
          %2816 = vsyncadd %s2790, %s2815
          %s2817 = smul.addr %s2813, 64
          %s2818 = scalar_lea.hbm %s15, %s2817
          %s2819 = sshll.u32 %s2793, 4
          %s2820 = int_to_ptr.vmem [resolvable:$true] %s2819
          %2825 = dma.vmem_to_hbm [thread:$0]  %s2820, 2048, %s2818, %s2790, 64, 64, 4
        $region116: #{tpu_custom_call.1} parent=75 // pred_fallthru
          _
      $region76: #{tpu_custom_call.1} parent=5 // pred_fallthru
        _
      %p2826 = scmp.le.s32.totalorder 2, %s37
      // Predicated region
      $region117: #{tpu_custom_call.1} parent=5 // pred_check
        %p2827 = pneg %p2826
      $region118: #{tpu_custom_call.1} parent=5 // pred_check_branch
        %2829 = sbr.rel (%p2827) target = $region120
      $region119: #{tpu_custom_call.1} parent=5 // pred_region
        %s2830 = ssub.s32 %s37, 2
        // Predicated region
        $region121: #{tpu_custom_call.1} parent=119 // pred_check
          %p2831 = pneg %p370
        $region122: #{tpu_custom_call.1} parent=119 // pred_check_branch
          %2833 = sbr.rel (%p2831) target = $region124
        $region123: #{tpu_custom_call.1} parent=119 // pred_region
          %s2834 = sand.u32 %s355, 1
          %s2835 = scalar_lea.sflag [#allocation4], %s2834
          %s2836 = sand.u32 %s355, 1
          %s2837 = smul.addr %s2836, 128
          %s2838 = scalar_lea.vmem [#allocation16], %s2837
          %2839 = dma.done %s2835, 2048
        $region124: #{tpu_custom_call.1} parent=119 // pred_fallthru
          _
        // Predicated region
        $region125: #{tpu_custom_call.1} parent=119 // pred_check
          %p2840 = pneg %p396
        $region126: #{tpu_custom_call.1} parent=119 // pred_check_branch
          %2842 = sbr.rel (%p2840) target = $region128
        $region127: #{tpu_custom_call.1} parent=119 // pred_region
          %s2843 = sand.u32 %s381, 1
          %s2844 = scalar_lea.sflag [#allocation18], %s2843
          %s2845 = sand.u32 %s381, 1
          %s2846 = smul.addr %s2845, 128
          %s2847 = scalar_lea.vmem [#allocation17], %s2846
          %2848 = dma.done %s2844, 2048
        $region128: #{tpu_custom_call.1} parent=119 // pred_fallthru
          _
      $region120: #{tpu_custom_call.1} parent=5 // pred_fallthru
        _
    $region6: #{tpu_custom_call.1} parent=1 // loop_footer
      %s41 = sadd.s32 1, %s37
    $region7: #{tpu_custom_call.1} parent=1 // loop_footer_branch
      %36 = sbr.rel target = $region3
    $region8: #{tpu_custom_call.1} parent=1 // loop_exit
      _
    %2849 = vsyncpa [#allocation3], 1
    %s2850 = scalar_lea.sflag [#allocation3], 1
    %2851 = vsyncpa %s2850, 1
    %2852 = vsyncpa [#allocation6], 1
    %s2853 = scalar_lea.sflag [#allocation6], 1
    %2854 = vsyncpa %s2853, 1
    %2855 = vsyncpa [#allocation9], 1
    %2856 = vsyncpa [#allocation12], 1
    %2857 = vsyncpa [#allocation15], 1
    %2858 = vsyncpa [#allocation4], 1
    %s2859 = scalar_lea.sflag [#allocation4], 1
    %2860 = vsyncpa %s2859, 1
    %2861 = vsyncpa [#allocation18], 1
    %s2862 = scalar_lea.sflag [#allocation18], 1
    %2863 = vsyncpa %s2862, 1

</llo_original>
